<compile_context>
chip_gen: v6e
topology: v6e:2x2x1
jax: 0.10.0
libtpu: 0.0.40
codegen_flags: <defaults>
</compile_context>

<pallas_src>
import functools
import math

import jax
import jax.numpy as jnp
from jax import lax
from jax.experimental import pallas as pl
from jax.experimental.pallas import tpu as pltpu


def _vmem_limit_bytes():
    # Generation-aware VMEM budget: ~75% of physical capacity (v5e/v6e ~96 MiB,
    # v7x ~48 MiB) leaves headroom for pipeline buffers / internal scratch.
    try:
        cap = pltpu.get_tpu_info().vmem_capacity_bytes
    except Exception:
        cap = 64 * 1024 * 1024
    return int(cap) * 3 // 4


# ----------------------------------------------------------------------------
# Fused bidirectional GRU layer, tiled over (direction, time-tile).
#   grid = (2, nT); dimension_semantics = ("parallel", "arbitrary")
#   x0_ref: (tT, B, D0)   first feature segment tile  (embeddings / y_fwd of prev layer)
#   x1_ref: (tT, B, D1)   second feature segment tile (elmo / y_bwd of prev layer)
#   wih0_ref: (D0, 3H) bf16   this direction's input projection rows for x0
#   wih1_ref: (D1, 3H) bf16   rows for x1
#   bih_ref:  (1, 3H)  f32    input bias  [r z n]
#   whh_ref:  (H, 3H)  bf16   fused recurrent weights [r z n]
#   bhh_ref:  (1, 3H)  f32    recurrent bias
#   y_ref:    (tT, B, H) bf16 this direction's outputs (already in forward time order)
#   gi_scr:   (tT, B, 3H) f32 VMEM scratch: hoisted per-tile input projections
#   h_scr:    (B, H) f32      VMEM scratch: hidden carry across time tiles
# ----------------------------------------------------------------------------
def _bigru_kernel(x0_ref, x1_ref, wih0_ref, wih1_ref, bih_ref, whh_ref, bhh_ref,
                  y_ref, gi_scr, h_scr, *, hidden, unroll):
    H = hidden
    tT, B, D0 = x0_ref.shape
    D1 = x1_ref.shape[2]
    d = pl.program_id(0)          # 0 = forward sweep, 1 = backward sweep

    # Zero the hidden carry at the start of each direction's time sweep.
    @pl.when(pl.program_id(1) == 0)
    def _():
        h_scr[...] = jnp.zeros_like(h_scr)

    # Hoisted input projection for this time tile: one bf16 MXU matmul per segment
    # over all tT*B tokens; only h @ W_hh stays inside the serial recurrence.
    x0 = x0_ref[...].reshape(tT * B, D0).astype(jnp.bfloat16)
    x1 = x1_ref[...].reshape(tT * B, D1).astype(jnp.bfloat16)
    gi = (jnp.dot(x0, wih0_ref[...], preferred_element_type=jnp.float32)
          + jnp.dot(x1, wih1_ref[...], preferred_element_type=jnp.float32)
          + bih_ref[...])                                      # (tT*B, 3H) f32
    gi_scr[...] = gi.reshape(tT, B, 3 * H)

    def body(i, h):
        # Local timestep: forward sweeps 0..tT-1, backward sweeps tT-1..0.
        lt = i + d * (tT - 1 - 2 * i)
        gi_t = gi_scr[lt]                                      # (B, 3H) f32
        # Single fused (B,H)@(H,3H) bf16 recurrent matmul, fed straight from the
        # weight ref (no hoisted per-gate weight values -> no long live ranges).
        gh = (jnp.dot(h.astype(jnp.bfloat16), whh_ref[...],
                      preferred_element_type=jnp.float32) + bhh_ref[...])
        r = jax.nn.sigmoid(gi_t[:, :H] + gh[:, :H])
        z = jax.nn.sigmoid(gi_t[:, H:2 * H] + gh[:, H:2 * H])
        n = jnp.tanh(gi_t[:, 2 * H:] + r * gh[:, 2 * H:])
        h = (1.0 - z) * n + z * h
        y_ref[lt] = h.astype(y_ref.dtype)
        return h

    h_scr[...] = lax.fori_loop(0, tT, body, h_scr[...], unroll=unroll)


def bigru_layer(x0, x1, lp, hidden, time_tile=32):
    T, B, D0 = x0.shape
    D1 = x1.shape[2]
    H = hidden

    tT = T
    for cand in (time_tile, 16, 8, 4, 2, 1):
        if cand <= T and T % cand == 0:
            tT = cand
            break
    nT = T // tT
    unroll = tT if tT <= 8 else 8          # bounded unroll: no spill blow-up at big tT

    # Backward direction (d==1) sweeps time tiles in reverse.
    tmap = lambda d, t: t + d * (nT - 1 - 2 * t)

    kernel = functools.partial(_bigru_kernel, hidden=H, unroll=unroll)
    y = pl.pallas_call(
        kernel,
        out_shape=jax.ShapeDtypeStruct((2, T, B, H), jnp.bfloat16),
        grid=(2, nT),
        in_specs=[
            pl.BlockSpec((tT, B, D0), lambda d, t: (tmap(d, t), 0, 0)),
            pl.BlockSpec((tT, B, D1), lambda d, t: (tmap(d, t), 0, 0)),
            pl.BlockSpec((None, D0, 3 * H), lambda d, t: (d, 0, 0)),
            pl.BlockSpec((None, D1, 3 * H), lambda d, t: (d, 0, 0)),
            pl.BlockSpec((None, 1, 3 * H), lambda d, t: (d, 0, 0)),
            pl.BlockSpec((None, H, 3 * H), lambda d, t: (d, 0, 0)),
            pl.BlockSpec((None, 1, 3 * H), lambda d, t: (d, 0, 0)),
        ],
        out_specs=pl.BlockSpec((None, tT, B, H), lambda d, t: (d, tmap(d, t), 0, 0)),
        scratch_shapes=[
            pltpu.VMEM((tT, B, 3 * H), jnp.float32),   # hoisted per-tile gate inputs
            pltpu.VMEM((B, H), jnp.float32),           # hidden carry across time tiles
        ],
        compiler_params=pltpu.CompilerParams(
            dimension_semantics=("parallel", "arbitrary"),
            vmem_limit_bytes=_vmem_limit_bytes()),
    )(x0, x1, lp["w_ih0"], lp["w_ih1"], lp["b_ih"], lp["w_hh"], lp["b_hh"])
    return y[0], y[1]


# ----------------------------------------------------------------------------
# Classifier head: Linear-ReLU-Linear-ReLU-Linear-ReLU-Linear (dropout = identity).
# First linear consumes (y_fwd, y_bwd) as two segments (2H concat folded into the
# matmul).  Tiled over N tokens ("parallel"), weights resident, lane-padded output.
# ----------------------------------------------------------------------------
def _mlp_kernel(yf_ref, yb_ref, w1f_ref, w1b_ref, b1_ref, w2_ref, b2_ref,
                w3_ref, b3_ref, w4_ref, b4_ref, o_ref):
    bf16 = jnp.bfloat16
    h = (jnp.dot(yf_ref[...].astype(bf16), w1f_ref[...], preferred_element_type=jnp.float32)
         + jnp.dot(yb_ref[...].astype(bf16), w1b_ref[...], preferred_element_type=jnp.float32)
         + b1_ref[...])
    h = jnp.maximum(h, 0.0)
    h = jnp.maximum(
        jnp.dot(h.astype(bf16), w2_ref[...], preferred_element_type=jnp.float32) + b2_ref[...], 0.0)
    h = jnp.maximum(
        jnp.dot(h.astype(bf16), w3_ref[...], preferred_element_type=jnp.float32) + b3_ref[...], 0.0)
    o_ref[...] = (
        jnp.dot(h.astype(bf16), w4_ref[...], preferred_element_type=jnp.float32) + b4_ref[...])


def _pick_token_tile(n):
    # Bigger tiles amortize the ~0.35us per-grid-step overhead and fill the
    # 256-row MXU on v6e/v7x; 512 rows is still only a few MiB of VMEM per tile.
    if n >= 512:
        return 512
    return ((n + 7) // 8) * 8


def mlp_classify(yf, yb, cls_params):
    N, H = yf.shape
    (w1f, w1b, b1), (w2, b2), (w3, b3), (w4p, b4p) = cls_params
    Cp = w4p.shape[1]                               # lane-padded class dim (mult of 128)
    tn = _pick_token_tile(N)
    n_pad = pl.cdiv(N, tn) * tn
    if n_pad != N:
        yf = jnp.pad(yf, ((0, n_pad - N), (0, 0)))
        yb = jnp.pad(yb, ((0, n_pad - N), (0, 0)))
    weights = (w1f, w1b, b1, w2, b2, w3, b3, w4p, b4p)
    in_specs = [pl.BlockSpec((tn, H), lambda i: (i, 0)),
                pl.BlockSpec((tn, H), lambda i: (i, 0))]
    in_specs += [pl.BlockSpec(w.shape, lambda i, n=w.ndim: (0,) * n) for w in weights]
    out = pl.pallas_call(
        _mlp_kernel,
        out_shape=jax.ShapeDtypeStruct((n_pad, Cp), jnp.float32),
        grid=(n_pad // tn,),
        in_specs=in_specs,
        out_specs=pl.BlockSpec((tn, Cp), lambda i: (i, 0)),
        compiler_params=pltpu.CompilerParams(
            dimension_semantics=("parallel",),
            vmem_limit_bytes=_vmem_limit_bytes()),
    )(yf, yb, *weights)
    return out[:N]


# ----------------------------------------------------------------------------
# Parameter construction (deterministic, matches module __init__ shapes)
# ----------------------------------------------------------------------------
def init_params(key, vocab, embed_dim, hidden, num_layers, num_class):
    keys = iter(jax.random.split(key, 256))
    H = hidden
    bf16 = jnp.bfloat16
    params = {"hidden": H, "num_layers": num_layers, "num_class": num_class}
    # bf16 embedding table: halves the HBM traffic of the gathered (T,B,E) activation.
    params["embeddings"] = jax.random.normal(
        next(keys), (vocab, embed_dim), jnp.float32).astype(bf16)

    def uniform(shape, bound):
        return jax.random.uniform(next(keys), shape, jnp.float32, -bound, bound)

    def gru_layer(d0, d1):
        bound = 1.0 / math.sqrt(H)
        # Gate order [r, z, n]; weights stored (in_dim, 3H) per direction.
        w_ih_f = uniform((d0 + d1, 3 * H), bound)
        w_ih_b = uniform((d0 + d1, 3 * H), bound)
        w_hh_f = uniform((H, 3 * H), bound)
        w_hh_b = uniform((H, 3 * H), bound)
        b_ih = jnp.stack([uniform((1, 3 * H), bound), uniform((1, 3 * H), bound)])
        b_hh = jnp.stack([uniform((1, 3 * H), bound), uniform((1, 3 * H), bound)])
        w_ih = jnp.stack([w_ih_f, w_ih_b])                      # (2, d0+d1, 3H)
        return {
            "w_ih0": w_ih[:, :d0].astype(bf16),                 # rows for segment 0
            "w_ih1": w_ih[:, d0:].astype(bf16),                 # rows for segment 1
            "b_ih": b_ih,                                       # (2, 1, 3H) f32
            "w_hh": jnp.stack([w_hh_f, w_hh_b]).astype(bf16),   # (2, H, 3H) bf16 fused gates
            "b_hh": b_hh,                                       # (2, 1, 3H) f32
        }

    params["gru"] = []
    for layer in range(num_layers):
        if layer == 0:
            params["gru"].append(gru_layer(embed_dim, 2 * H))   # [embed | elmo]
        else:
            params["gru"].append(gru_layer(H, H))               # [y_fwd | y_bwd]

    def linear(fan_in, fan_out):
        bound = math.sqrt(6.0 / fan_in)                         # kaiming_uniform_, bias=0
        return uniform((fan_in, fan_out), bound), jnp.zeros((1, fan_out), jnp.float32)

    w1, b1 = linear(2 * H, 2 * H)
    w2, b2 = linear(2 * H, H)
    w3, b3 = linear(H, H)
    w4, b4 = linear(H, num_class)
    # Lane-pad classifier output columns to a multiple of 128 -> lane-dense stores;
    # padded columns are zero (weights + bias) and sliced off in the wrapper.
    c_pad = ((num_class + 127) // 128) * 128
    w4p = jnp.pad(w4, ((0, 0), (0, c_pad - num_class)))
    b4p = jnp.pad(b4, ((0, 0), (0, c_pad - num_class)))
    params["cls"] = [
        (w1[:H].astype(bf16), w1[H:].astype(bf16), b1),         # split at fwd/bwd boundary
        (w2.astype(bf16), b2),
        (w3.astype(bf16), b3),
        (w4p.astype(bf16), b4p),
    ]
    return params


# ----------------------------------------------------------------------------
# Forward pass (matches SeqTagger.forward, eval mode)
# ----------------------------------------------------------------------------
def seq_tagger_forward(params, tokens, elmo):
    H = params["hidden"]
    C = params["num_class"]
    B, T = tokens.shape
    # Pad batch to a multiple of 8 so the sublane dim of every kernel tile is dense.
    B_pad = ((B + 7) // 8) * 8
    if B_pad != B:
        tokens = jnp.pad(tokens, ((0, B_pad - B), (0, 0)))
        elmo = jnp.pad(elmo, ((0, B_pad - B), (0, 0), (0, 0)))
    # Embedding gather directly in time-major layout; bf16 activations into layer 0.
    # TODO(synk): the gather could be fused into the layer-0 GRU kernel via
    # PrefetchScalarGridSpec + pl.Element row gather; kept outside for clarity.
    x0 = jnp.take(params["embeddings"], jnp.transpose(tokens), axis=0)   # (T, Bp, E) bf16
    x1 = jnp.transpose(elmo, (1, 0, 2)).astype(jnp.bfloat16)             # (T, Bp, 2H) bf16

    # Eval mode: inter-layer GRU dropout and classifier dropout are identity.
    for lp in params["gru"]:
        x0, x1 = bigru_layer(x0, x1, lp, H)      # (y_fwd, y_bwd) bf16; 2H concat never built

    N = T * B_pad
    logits = mlp_classify(x0.reshape(N, H), x1.reshape(N, H), params["cls"])  # (N, Cpad)
    logits = logits[:, :C].reshape(T, B_pad, C)
    return jnp.transpose(logits, (1, 0, 2))[:B]                               # (B, T, C)


if __name__ == "__main__":
    VOCAB, EMBED_DIM, HIDDEN, NUM_LAYERS, NUM_CLASS = 32, 32, 16, 2, 8
    B, T = 2, 8

    key = jax.random.PRNGKey(0)
    k_par, k_tok, k_elmo = jax.random.split(key, 3)
    params = init_params(k_par, VOCAB, EMBED_DIM, HIDDEN, NUM_LAYERS, NUM_CLASS)

    tokens = jax.random.randint(k_tok, (B, T), 0, VOCAB, dtype=jnp.int32)
    elmo = jax.random.normal(k_elmo, (B, T, 2 * HIDDEN), jnp.float32)

    out = seq_tagger_forward(params, tokens, elmo)
    out = jax.block_until_ready(out)
    assert out.shape == (B, T, NUM_CLASS), out.shape
    assert jnp.all(jnp.isfinite(out))
    print("KERNEL_OK")
</pallas_src>

<mosaic_0001>
module attributes {stable_mosaic.version = 11 : i64} {
  func.func @_bigru_kernel(%arg0: i32, %arg1: i32, %arg2: memref<8x8x32xbf16, #tpu.memory_space<vmem>>, %arg3: memref<8x8x32xbf16, #tpu.memory_space<vmem>>, %arg4: memref<1x32x48xbf16, #tpu.memory_space<vmem>>, %arg5: memref<1x32x48xbf16, #tpu.memory_space<vmem>>, %arg6: memref<1x1x48xf32, #tpu.memory_space<vmem>>, %arg7: memref<1x16x48xbf16, #tpu.memory_space<vmem>>, %arg8: memref<1x1x48xf32, #tpu.memory_space<vmem>>, %arg9: memref<1x8x8x16xbf16, #tpu.memory_space<vmem>>, %arg10: memref<8x8x48xf32, #tpu.memory_space<vmem>>, %arg11: memref<8x16xf32, #tpu.memory_space<vmem>>) attributes {dimension_semantics = [#tpu.dimension_semantics<parallel>, #tpu.dimension_semantics<arbitrary>], iteration_bounds = array<i64: 2, 1>, scalar_prefetch = 0 : i64, scratch_operands = 2 : i64, tpu.core_type = #tpu.core_type<tc>, window_params = [{transform_indices = @transform_0, window_bounds = array<i64: 8, 8, 32>}, {transform_indices = @transform_1, window_bounds = array<i64: 8, 8, 32>}, {transform_indices = @transform_2, window_bounds = array<i64: 1, 32, 48>}, {transform_indices = @transform_3, window_bounds = array<i64: 1, 32, 48>}, {transform_indices = @transform_4, window_bounds = array<i64: 1, 1, 48>}, {transform_indices = @transform_5, window_bounds = array<i64: 1, 16, 48>}, {transform_indices = @transform_6, window_bounds = array<i64: 1, 1, 48>}, {transform_indices = @transform_7, window_bounds = array<i64: 1, 8, 8, 16>}]} {
    %c0_i32 = arith.constant 0 : i32
    %0 = arith.cmpi eq, %arg1, %c0_i32 : i32
    %1 = arith.extui %0 : i1 to i32
    %c0_i32_0 = arith.constant 0 : i32
    %2 = arith.cmpi ne, %1, %c0_i32_0 : i32
    scf.if %2 {
      %cst_160 = arith.constant 0.000000e+00 : f32
      %390 = vector.broadcast %cst_160 : f32 to vector<8x16xf32>
      %c0_161 = arith.constant 0 : index
      %c0_162 = arith.constant 0 : index
      %391 = vector.load %arg11[%c0_161, %c0_162] : memref<8x16xf32, #tpu.memory_space<vmem>>, vector<8x16xf32>
      tpu.vector_store %arg11[%c0_161, %c0_162], %390 {strides = array<i32>} : memref<8x16xf32, #tpu.memory_space<vmem>>, vector<8x16xf32>,
    } else {
    }
    %c0 = arith.constant 0 : index
    %c0_1 = arith.constant 0 : index
    %c0_2 = arith.constant 0 : index
    %3 = vector.load %arg2[%c0, %c0_1, %c0_2] : memref<8x8x32xbf16, #tpu.memory_space<vmem>>, vector<8x8x32xbf16>
    %4 = vector.shape_cast %3 : vector<8x8x32xbf16> to vector<64x32xbf16>
    %c0_3 = arith.constant 0 : index
    %c0_4 = arith.constant 0 : index
    %c0_5 = arith.constant 0 : index
    %5 = vector.load %arg3[%c0_3, %c0_4, %c0_5] : memref<8x8x32xbf16, #tpu.memory_space<vmem>>, vector<8x8x32xbf16>
    %6 = vector.shape_cast %5 : vector<8x8x32xbf16> to vector<64x32xbf16>
    %c0_6 = arith.constant 0 : index
    %c0_7 = arith.constant 0 : index
    %c0_8 = arith.constant 0 : index
    %7 = vector.load %arg4[%c0_6, %c0_7, %c0_8] : memref<1x32x48xbf16, #tpu.memory_space<vmem>>, vector<1x32x48xbf16>
    %8 = vector.shape_cast %7 : vector<1x32x48xbf16> to vector<32x48xbf16>
    %cst = arith.constant dense<0.000000e+00> : vector<64x48xf32>
    %9 = tpu.matmul %4, %8, %cst {dimension_numbers = #tpu.dot_dimension_numbers<[1], [0], [0], [1], [0, 0, 1, 1], [], []>} : vector<64x32xbf16>, vector<32x48xbf16>, vector<64x48xf32> -> vector<64x48xf32>
    %c0_9 = arith.constant 0 : index
    %c0_10 = arith.constant 0 : index
    %c0_11 = arith.constant 0 : index
    %10 = vector.load %arg5[%c0_9, %c0_10, %c0_11] : memref<1x32x48xbf16, #tpu.memory_space<vmem>>, vector<1x32x48xbf16>
    %11 = vector.shape_cast %10 : vector<1x32x48xbf16> to vector<32x48xbf16>
    %cst_12 = arith.constant dense<0.000000e+00> : vector<64x48xf32>
    %12 = tpu.matmul %6, %11, %cst_12 {dimension_numbers = #tpu.dot_dimension_numbers<[1], [0], [0], [1], [0, 0, 1, 1], [], []>} : vector<64x32xbf16>, vector<32x48xbf16>, vector<64x48xf32> -> vector<64x48xf32>
    %13 = arith.addf %9, %12 : vector<64x48xf32>
    %c0_13 = arith.constant 0 : index
    %c0_14 = arith.constant 0 : index
    %c0_15 = arith.constant 0 : index
    %14 = vector.load %arg6[%c0_13, %c0_14, %c0_15] : memref<1x1x48xf32, #tpu.memory_space<vmem>>, vector<1x1x48xf32>
    %15 = vector.shape_cast %14 : vector<1x1x48xf32> to vector<1x48xf32>
    %16 = vector.broadcast %15 : vector<1x48xf32> to vector<64x48xf32>
    %17 = arith.addf %13, %16 : vector<64x48xf32>
    %18 = vector.shape_cast %17 : vector<64x48xf32> to vector<8x8x48xf32>
    %c0_16 = arith.constant 0 : index
    %c0_17 = arith.constant 0 : index
    %c0_18 = arith.constant 0 : index
    %19 = vector.load %arg10[%c0_16, %c0_17, %c0_18] : memref<8x8x48xf32, #tpu.memory_space<vmem>>, vector<8x8x48xf32>
    tpu.vector_store %arg10[%c0_16, %c0_17, %c0_18], %18 {strides = array<i32>} : memref<8x8x48xf32, #tpu.memory_space<vmem>>, vector<8x8x48xf32>,
    %c0_19 = arith.constant 0 : index
    %c0_20 = arith.constant 0 : index
    %20 = vector.load %arg11[%c0_19, %c0_20] : memref<8x16xf32, #tpu.memory_space<vmem>>, vector<8x16xf32>
    %c0_i32_21 = arith.constant 0 : i32
    %c2_i32 = arith.constant 2 : i32
    %21 = arith.muli %c2_i32, %c0_i32_21 : i32
    %c7_i32 = arith.constant 7 : i32
    %22 = arith.subi %c7_i32, %21 : i32
    %23 = arith.muli %arg0, %22 : i32
    %24 = arith.addi %c0_i32_21, %23 : i32
    %25 = arith.index_cast %24 : i32 to index
    %c0_22 = arith.constant 0 : index
    %c0_23 = arith.constant 0 : index
    %26 = vector.load %arg10[%25, %c0_22, %c0_23] : memref<8x8x48xf32, #tpu.memory_space<vmem>>, vector<1x8x48xf32>
    %27 = vector.shape_cast %26 : vector<1x8x48xf32> to vector<8x48xf32>
    %28 = arith.truncf %20 : vector<8x16xf32> to vector<8x16xbf16>
    %c0_24 = arith.constant 0 : index
    %c0_25 = arith.constant 0 : index
    %c0_26 = arith.constant 0 : index
    %29 = vector.load %arg7[%c0_24, %c0_25, %c0_26] : memref<1x16x48xbf16, #tpu.memory_space<vmem>>, vector<1x16x48xbf16>
    %30 = vector.shape_cast %29 : vector<1x16x48xbf16> to vector<16x48xbf16>
    %cst_27 = arith.constant dense<0.000000e+00> : vector<8x48xf32>
    %31 = tpu.matmul %28, %30, %cst_27 {dimension_numbers = #tpu.dot_dimension_numbers<[1], [0], [0], [1], [0, 0, 1, 1], [], []>} : vector<8x16xbf16>, vector<16x48xbf16>, vector<8x48xf32> -> vector<8x48xf32>
    %c0_28 = arith.constant 0 : index
    %c0_29 = arith.constant 0 : index
    %c0_30 = arith.constant 0 : index
    %32 = vector.load %arg8[%c0_28, %c0_29, %c0_30] : memref<1x1x48xf32, #tpu.memory_space<vmem>>, vector<1x1x48xf32>
    %33 = vector.shape_cast %32 : vector<1x1x48xf32> to vector<1x48xf32>
    %34 = vector.broadcast %33 : vector<1x48xf32> to vector<8x48xf32>
    %35 = arith.addf %31, %34 : vector<8x48xf32>
    %36 = vector.extract_strided_slice %27 {offsets = [0, 0], sizes = [8, 16], strides = [1, 1]} : vector<8x48xf32> to vector<8x16xf32>
    %37 = vector.extract_strided_slice %35 {offsets = [0, 0], sizes = [8, 16], strides = [1, 1]} : vector<8x48xf32> to vector<8x16xf32>
    %38 = arith.addf %36, %37 : vector<8x16xf32>
    %39 = arith.negf %38 : vector<8x16xf32>
    %40 = math.exp %39 : vector<8x16xf32>
    %cst_31 = arith.constant 1.000000e+00 : f32
    %41 = vector.broadcast %cst_31 : f32 to vector<8x16xf32>
    %42 = arith.addf %41, %40 : vector<8x16xf32>
    %43 = arith.divf %41, %42 : vector<8x16xf32>
    %44 = vector.extract_strided_slice %27 {offsets = [0, 16], sizes = [8, 16], strides = [1, 1]} : vector<8x48xf32> to vector<8x16xf32>
    %45 = vector.extract_strided_slice %35 {offsets = [0, 16], sizes = [8, 16], strides = [1, 1]} : vector<8x48xf32> to vector<8x16xf32>
    %46 = arith.addf %44, %45 : vector<8x16xf32>
    %47 = arith.negf %46 : vector<8x16xf32>
    %48 = math.exp %47 : vector<8x16xf32>
    %cst_32 = arith.constant 1.000000e+00 : f32
    %49 = vector.broadcast %cst_32 : f32 to vector<8x16xf32>
    %50 = arith.addf %49, %48 : vector<8x16xf32>
    %51 = arith.divf %49, %50 : vector<8x16xf32>
    %52 = vector.extract_strided_slice %27 {offsets = [0, 32], sizes = [8, 16], strides = [1, 1]} : vector<8x48xf32> to vector<8x16xf32>
    %53 = vector.extract_strided_slice %35 {offsets = [0, 32], sizes = [8, 16], strides = [1, 1]} : vector<8x48xf32> to vector<8x16xf32>
    %54 = arith.mulf %43, %53 : vector<8x16xf32>
    %55 = arith.addf %52, %54 : vector<8x16xf32>
    %56 = math.tanh %55 : vector<8x16xf32>
    %cst_33 = arith.constant 1.000000e+00 : f32
    %57 = vector.broadcast %cst_33 : f32 to vector<8x16xf32>
    %58 = arith.subf %57, %51 : vector<8x16xf32>
    %59 = arith.mulf %58, %56 : vector<8x16xf32>
    %60 = arith.mulf %51, %20 : vector<8x16xf32>
    %61 = arith.addf %59, %60 : vector<8x16xf32>
    %62 = arith.truncf %61 : vector<8x16xf32> to vector<8x16xbf16>
    %c0_34 = arith.constant 0 : index
    %63 = arith.index_cast %24 : i32 to index
    %c0_35 = arith.constant 0 : index
    %c0_36 = arith.constant 0 : index
    %64 = vector.load %arg9[%c0_34, %63, %c0_35, %c0_36] : memref<1x8x8x16xbf16, #tpu.memory_space<vmem>>, vector<1x1x8x16xbf16>
    %65 = vector.shape_cast %64 : vector<1x1x8x16xbf16> to vector<8x16xbf16>
    %66 = vector.shape_cast %62 : vector<8x16xbf16> to vector<1x1x8x16xbf16>
    tpu.vector_store %arg9[%c0_34, %63, %c0_35, %c0_36], %66 {strides = array<i32>} : memref<1x8x8x16xbf16, #tpu.memory_space<vmem>>, vector<1x1x8x16xbf16>,
    %c1_i32 = arith.constant 1 : i32
    %c2_i32_37 = arith.constant 2 : i32
    %67 = arith.muli %c2_i32_37, %c1_i32 : i32
    %c7_i32_38 = arith.constant 7 : i32
    %68 = arith.subi %c7_i32_38, %67 : i32
    %69 = arith.muli %arg0, %68 : i32
    %70 = arith.addi %c1_i32, %69 : i32
    %71 = arith.index_cast %70 : i32 to index
    %c0_39 = arith.constant 0 : index
    %c0_40 = arith.constant 0 : index
    %72 = vector.load %arg10[%71, %c0_39, %c0_40] : memref<8x8x48xf32, #tpu.memory_space<vmem>>, vector<1x8x48xf32>
    %73 = vector.shape_cast %72 : vector<1x8x48xf32> to vector<8x48xf32>
    %74 = arith.truncf %61 : vector<8x16xf32> to vector<8x16xbf16>
    %c0_41 = arith.constant 0 : index
    %c0_42 = arith.constant 0 : index
    %c0_43 = arith.constant 0 : index
    %75 = vector.load %arg7[%c0_41, %c0_42, %c0_43] : memref<1x16x48xbf16, #tpu.memory_space<vmem>>, vector<1x16x48xbf16>
    %76 = vector.shape_cast %75 : vector<1x16x48xbf16> to vector<16x48xbf16>
    %cst_44 = arith.constant dense<0.000000e+00> : vector<8x48xf32>
    %77 = tpu.matmul %74, %76, %cst_44 {dimension_numbers = #tpu.dot_dimension_numbers<[1], [0], [0], [1], [0, 0, 1, 1], [], []>} : vector<8x16xbf16>, vector<16x48xbf16>, vector<8x48xf32> -> vector<8x48xf32>
    %c0_45 = arith.constant 0 : index
    %c0_46 = arith.constant 0 : index
    %c0_47 = arith.constant 0 : index
    %78 = vector.load %arg8[%c0_45, %c0_46, %c0_47] : memref<1x1x48xf32, #tpu.memory_space<vmem>>, vector<1x1x48xf32>
    %79 = vector.shape_cast %78 : vector<1x1x48xf32> to vector<1x48xf32>
    %80 = vector.broadcast %79 : vector<1x48xf32> to vector<8x48xf32>
    %81 = arith.addf %77, %80 : vector<8x48xf32>
    %82 = vector.extract_strided_slice %73 {offsets = [0, 0], sizes = [8, 16], strides = [1, 1]} : vector<8x48xf32> to vector<8x16xf32>
    %83 = vector.extract_strided_slice %81 {offsets = [0, 0], sizes = [8, 16], strides = [1, 1]} : vector<8x48xf32> to vector<8x16xf32>
    %84 = arith.addf %82, %83 : vector<8x16xf32>
    %85 = arith.negf %84 : vector<8x16xf32>
    %86 = math.exp %85 : vector<8x16xf32>
    %cst_48 = arith.constant 1.000000e+00 : f32
    %87 = vector.broadcast %cst_48 : f32 to vector<8x16xf32>
    %88 = arith.addf %87, %86 : vector<8x16xf32>
    %89 = arith.divf %87, %88 : vector<8x16xf32>
    %90 = vector.extract_strided_slice %73 {offsets = [0, 16], sizes = [8, 16], strides = [1, 1]} : vector<8x48xf32> to vector<8x16xf32>
    %91 = vector.extract_strided_slice %81 {offsets = [0, 16], sizes = [8, 16], strides = [1, 1]} : vector<8x48xf32> to vector<8x16xf32>
    %92 = arith.addf %90, %91 : vector<8x16xf32>
    %93 = arith.negf %92 : vector<8x16xf32>
    %94 = math.exp %93 : vector<8x16xf32>
    %cst_49 = arith.constant 1.000000e+00 : f32
    %95 = vector.broadcast %cst_49 : f32 to vector<8x16xf32>
    %96 = arith.addf %95, %94 : vector<8x16xf32>
    %97 = arith.divf %95, %96 : vector<8x16xf32>
    %98 = vector.extract_strided_slice %73 {offsets = [0, 32], sizes = [8, 16], strides = [1, 1]} : vector<8x48xf32> to vector<8x16xf32>
    %99 = vector.extract_strided_slice %81 {offsets = [0, 32], sizes = [8, 16], strides = [1, 1]} : vector<8x48xf32> to vector<8x16xf32>
    %100 = arith.mulf %89, %99 : vector<8x16xf32>
    %101 = arith.addf %98, %100 : vector<8x16xf32>
    %102 = math.tanh %101 : vector<8x16xf32>
    %cst_50 = arith.constant 1.000000e+00 : f32
    %103 = vector.broadcast %cst_50 : f32 to vector<8x16xf32>
    %104 = arith.subf %103, %97 : vector<8x16xf32>
    %105 = arith.mulf %104, %102 : vector<8x16xf32>
    %106 = arith.mulf %97, %61 : vector<8x16xf32>
    %107 = arith.addf %105, %106 : vector<8x16xf32>
    %108 = arith.truncf %107 : vector<8x16xf32> to vector<8x16xbf16>
    %c0_51 = arith.constant 0 : index
    %109 = arith.index_cast %70 : i32 to index
    %c0_52 = arith.constant 0 : index
    %c0_53 = arith.constant 0 : index
    %110 = vector.load %arg9[%c0_51, %109, %c0_52, %c0_53] : memref<1x8x8x16xbf16, #tpu.memory_space<vmem>>, vector<1x1x8x16xbf16>
    %111 = vector.shape_cast %110 : vector<1x1x8x16xbf16> to vector<8x16xbf16>
    %112 = vector.shape_cast %108 : vector<8x16xbf16> to vector<1x1x8x16xbf16>
    tpu.vector_store %arg9[%c0_51, %109, %c0_52, %c0_53], %112 {strides = array<i32>} : memref<1x8x8x16xbf16, #tpu.memory_space<vmem>>, vector<1x1x8x16xbf16>,
    %c2_i32_54 = arith.constant 2 : i32
    %c2_i32_55 = arith.constant 2 : i32
    %113 = arith.muli %c2_i32_55, %c2_i32_54 : i32
    %c7_i32_56 = arith.constant 7 : i32
    %114 = arith.subi %c7_i32_56, %113 : i32
    %115 = arith.muli %arg0, %114 : i32
    %116 = arith.addi %c2_i32_54, %115 : i32
    %117 = arith.index_cast %116 : i32 to index
    %c0_57 = arith.constant 0 : index
    %c0_58 = arith.constant 0 : index
    %118 = vector.load %arg10[%117, %c0_57, %c0_58] : memref<8x8x48xf32, #tpu.memory_space<vmem>>, vector<1x8x48xf32>
    %119 = vector.shape_cast %118 : vector<1x8x48xf32> to vector<8x48xf32>
    %120 = arith.truncf %107 : vector<8x16xf32> to vector<8x16xbf16>
    %c0_59 = arith.constant 0 : index
    %c0_60 = arith.constant 0 : index
    %c0_61 = arith.constant 0 : index
    %121 = vector.load %arg7[%c0_59, %c0_60, %c0_61] : memref<1x16x48xbf16, #tpu.memory_space<vmem>>, vector<1x16x48xbf16>
    %122 = vector.shape_cast %121 : vector<1x16x48xbf16> to vector<16x48xbf16>
    %cst_62 = arith.constant dense<0.000000e+00> : vector<8x48xf32>
    %123 = tpu.matmul %120, %122, %cst_62 {dimension_numbers = #tpu.dot_dimension_numbers<[1], [0], [0], [1], [0, 0, 1, 1], [], []>} : vector<8x16xbf16>, vector<16x48xbf16>, vector<8x48xf32> -> vector<8x48xf32>
    %c0_63 = arith.constant 0 : index
    %c0_64 = arith.constant 0 : index
    %c0_65 = arith.constant 0 : index
    %124 = vector.load %arg8[%c0_63, %c0_64, %c0_65] : memref<1x1x48xf32, #tpu.memory_space<vmem>>, vector<1x1x48xf32>
    %125 = vector.shape_cast %124 : vector<1x1x48xf32> to vector<1x48xf32>
    %126 = vector.broadcast %125 : vector<1x48xf32> to vector<8x48xf32>
    %127 = arith.addf %123, %126 : vector<8x48xf32>
    %128 = vector.extract_strided_slice %119 {offsets = [0, 0], sizes = [8, 16], strides = [1, 1]} : vector<8x48xf32> to vector<8x16xf32>
    %129 = vector.extract_strided_slice %127 {offsets = [0, 0], sizes = [8, 16], strides = [1, 1]} : vector<8x48xf32> to vector<8x16xf32>
    %130 = arith.addf %128, %129 : vector<8x16xf32>
    %131 = arith.negf %130 : vector<8x16xf32>
    %132 = math.exp %131 : vector<8x16xf32>
    %cst_66 = arith.constant 1.000000e+00 : f32
    %133 = vector.broadcast %cst_66 : f32 to vector<8x16xf32>
    %134 = arith.addf %133, %132 : vector<8x16xf32>
    %135 = arith.divf %133, %134 : vector<8x16xf32>
    %136 = vector.extract_strided_slice %119 {offsets = [0, 16], sizes = [8, 16], strides = [1, 1]} : vector<8x48xf32> to vector<8x16xf32>
    %137 = vector.extract_strided_slice %127 {offsets = [0, 16], sizes = [8, 16], strides = [1, 1]} : vector<8x48xf32> to vector<8x16xf32>
    %138 = arith.addf %136, %137 : vector<8x16xf32>
    %139 = arith.negf %138 : vector<8x16xf32>
    %140 = math.exp %139 : vector<8x16xf32>
    %cst_67 = arith.constant 1.000000e+00 : f32
    %141 = vector.broadcast %cst_67 : f32 to vector<8x16xf32>
    %142 = arith.addf %141, %140 : vector<8x16xf32>
    %143 = arith.divf %141, %142 : vector<8x16xf32>
    %144 = vector.extract_strided_slice %119 {offsets = [0, 32], sizes = [8, 16], strides = [1, 1]} : vector<8x48xf32> to vector<8x16xf32>
    %145 = vector.extract_strided_slice %127 {offsets = [0, 32], sizes = [8, 16], strides = [1, 1]} : vector<8x48xf32> to vector<8x16xf32>
    %146 = arith.mulf %135, %145 : vector<8x16xf32>
    %147 = arith.addf %144, %146 : vector<8x16xf32>
    %148 = math.tanh %147 : vector<8x16xf32>
    %cst_68 = arith.constant 1.000000e+00 : f32
    %149 = vector.broadcast %cst_68 : f32 to vector<8x16xf32>
    %150 = arith.subf %149, %143 : vector<8x16xf32>
    %151 = arith.mulf %150, %148 : vector<8x16xf32>
    %152 = arith.mulf %143, %107 : vector<8x16xf32>
    %153 = arith.addf %151, %152 : vector<8x16xf32>
    %154 = arith.truncf %153 : vector<8x16xf32> to vector<8x16xbf16>
    %c0_69 = arith.constant 0 : index
    %155 = arith.index_cast %116 : i32 to index
    %c0_70 = arith.constant 0 : index
    %c0_71 = arith.constant 0 : index
    %156 = vector.load %arg9[%c0_69, %155, %c0_70, %c0_71] : memref<1x8x8x16xbf16, #tpu.memory_space<vmem>>, vector<1x1x8x16xbf16>
    %157 = vector.shape_cast %156 : vector<1x1x8x16xbf16> to vector<8x16xbf16>
    %158 = vector.shape_cast %154 : vector<8x16xbf16> to vector<1x1x8x16xbf16>
    tpu.vector_store %arg9[%c0_69, %155, %c0_70, %c0_71], %158 {strides = array<i32>} : memref<1x8x8x16xbf16, #tpu.memory_space<vmem>>, vector<1x1x8x16xbf16>,
    %c3_i32 = arith.constant 3 : i32
    %c2_i32_72 = arith.constant 2 : i32
    %159 = arith.muli %c2_i32_72, %c3_i32 : i32
    %c7_i32_73 = arith.constant 7 : i32
    %160 = arith.subi %c7_i32_73, %159 : i32
    %161 = arith.muli %arg0, %160 : i32
    %162 = arith.addi %c3_i32, %161 : i32
    %163 = arith.index_cast %162 : i32 to index
    %c0_74 = arith.constant 0 : index
    %c0_75 = arith.constant 0 : index
    %164 = vector.load %arg10[%163, %c0_74, %c0_75] : memref<8x8x48xf32, #tpu.memory_space<vmem>>, vector<1x8x48xf32>
    %165 = vector.shape_cast %164 : vector<1x8x48xf32> to vector<8x48xf32>
    %166 = arith.truncf %153 : vector<8x16xf32> to vector<8x16xbf16>
    %c0_76 = arith.constant 0 : index
    %c0_77 = arith.constant 0 : index
    %c0_78 = arith.constant 0 : index
    %167 = vector.load %arg7[%c0_76, %c0_77, %c0_78] : memref<1x16x48xbf16, #tpu.memory_space<vmem>>, vector<1x16x48xbf16>
    %168 = vector.shape_cast %167 : vector<1x16x48xbf16> to vector<16x48xbf16>
    %cst_79 = arith.constant dense<0.000000e+00> : vector<8x48xf32>
    %169 = tpu.matmul %166, %168, %cst_79 {dimension_numbers = #tpu.dot_dimension_numbers<[1], [0], [0], [1], [0, 0, 1, 1], [], []>} : vector<8x16xbf16>, vector<16x48xbf16>, vector<8x48xf32> -> vector<8x48xf32>
    %c0_80 = arith.constant 0 : index
    %c0_81 = arith.constant 0 : index
    %c0_82 = arith.constant 0 : index
    %170 = vector.load %arg8[%c0_80, %c0_81, %c0_82] : memref<1x1x48xf32, #tpu.memory_space<vmem>>, vector<1x1x48xf32>
    %171 = vector.shape_cast %170 : vector<1x1x48xf32> to vector<1x48xf32>
    %172 = vector.broadcast %171 : vector<1x48xf32> to vector<8x48xf32>
    %173 = arith.addf %169, %172 : vector<8x48xf32>
    %174 = vector.extract_strided_slice %165 {offsets = [0, 0], sizes = [8, 16], strides = [1, 1]} : vector<8x48xf32> to vector<8x16xf32>
    %175 = vector.extract_strided_slice %173 {offsets = [0, 0], sizes = [8, 16], strides = [1, 1]} : vector<8x48xf32> to vector<8x16xf32>
    %176 = arith.addf %174, %175 : vector<8x16xf32>
    %177 = arith.negf %176 : vector<8x16xf32>
    %178 = math.exp %177 : vector<8x16xf32>
    %cst_83 = arith.constant 1.000000e+00 : f32
    %179 = vector.broadcast %cst_83 : f32 to vector<8x16xf32>
    %180 = arith.addf %179, %178 : vector<8x16xf32>
    %181 = arith.divf %179, %180 : vector<8x16xf32>
    %182 = vector.extract_strided_slice %165 {offsets = [0, 16], sizes = [8, 16], strides = [1, 1]} : vector<8x48xf32> to vector<8x16xf32>
    %183 = vector.extract_strided_slice %173 {offsets = [0, 16], sizes = [8, 16], strides = [1, 1]} : vector<8x48xf32> to vector<8x16xf32>
    %184 = arith.addf %182, %183 : vector<8x16xf32>
    %185 = arith.negf %184 : vector<8x16xf32>
    %186 = math.exp %185 : vector<8x16xf32>
    %cst_84 = arith.constant 1.000000e+00 : f32
    %187 = vector.broadcast %cst_84 : f32 to vector<8x16xf32>
    %188 = arith.addf %187, %186 : vector<8x16xf32>
    %189 = arith.divf %187, %188 : vector<8x16xf32>
    %190 = vector.extract_strided_slice %165 {offsets = [0, 32], sizes = [8, 16], strides = [1, 1]} : vector<8x48xf32> to vector<8x16xf32>
    %191 = vector.extract_strided_slice %173 {offsets = [0, 32], sizes = [8, 16], strides = [1, 1]} : vector<8x48xf32> to vector<8x16xf32>
    %192 = arith.mulf %181, %191 : vector<8x16xf32>
    %193 = arith.addf %190, %192 : vector<8x16xf32>
    %194 = math.tanh %193 : vector<8x16xf32>
    %cst_85 = arith.constant 1.000000e+00 : f32
    %195 = vector.broadcast %cst_85 : f32 to vector<8x16xf32>
    %196 = arith.subf %195, %189 : vector<8x16xf32>
    %197 = arith.mulf %196, %194 : vector<8x16xf32>
    %198 = arith.mulf %189, %153 : vector<8x16xf32>
    %199 = arith.addf %197, %198 : vector<8x16xf32>
    %200 = arith.truncf %199 : vector<8x16xf32> to vector<8x16xbf16>
    %c0_86 = arith.constant 0 : index
    %201 = arith.index_cast %162 : i32 to index
    %c0_87 = arith.constant 0 : index
    %c0_88 = arith.constant 0 : index
    %202 = vector.load %arg9[%c0_86, %201, %c0_87, %c0_88] : memref<1x8x8x16xbf16, #tpu.memory_space<vmem>>, vector<1x1x8x16xbf16>
    %203 = vector.shape_cast %202 : vector<1x1x8x16xbf16> to vector<8x16xbf16>
    %204 = vector.shape_cast %200 : vector<8x16xbf16> to vector<1x1x8x16xbf16>
    tpu.vector_store %arg9[%c0_86, %201, %c0_87, %c0_88], %204 {strides = array<i32>} : memref<1x8x8x16xbf16, #tpu.memory_space<vmem>>, vector<1x1x8x16xbf16>,
    %c4_i32 = arith.constant 4 : i32
    %c2_i32_89 = arith.constant 2 : i32
    %205 = arith.muli %c2_i32_89, %c4_i32 : i32
    %c7_i32_90 = arith.constant 7 : i32
    %206 = arith.subi %c7_i32_90, %205 : i32
    %207 = arith.muli %arg0, %206 : i32
    %208 = arith.addi %c4_i32, %207 : i32
    %209 = arith.index_cast %208 : i32 to index
    %c0_91 = arith.constant 0 : index
    %c0_92 = arith.constant 0 : index
    %210 = vector.load %arg10[%209, %c0_91, %c0_92] : memref<8x8x48xf32, #tpu.memory_space<vmem>>, vector<1x8x48xf32>
    %211 = vector.shape_cast %210 : vector<1x8x48xf32> to vector<8x48xf32>
    %212 = arith.truncf %199 : vector<8x16xf32> to vector<8x16xbf16>
    %c0_93 = arith.constant 0 : index
    %c0_94 = arith.constant 0 : index
    %c0_95 = arith.constant 0 : index
    %213 = vector.load %arg7[%c0_93, %c0_94, %c0_95] : memref<1x16x48xbf16, #tpu.memory_space<vmem>>, vector<1x16x48xbf16>
    %214 = vector.shape_cast %213 : vector<1x16x48xbf16> to vector<16x48xbf16>
    %cst_96 = arith.constant dense<0.000000e+00> : vector<8x48xf32>
    %215 = tpu.matmul %212, %214, %cst_96 {dimension_numbers = #tpu.dot_dimension_numbers<[1], [0], [0], [1], [0, 0, 1, 1], [], []>} : vector<8x16xbf16>, vector<16x48xbf16>, vector<8x48xf32> -> vector<8x48xf32>
    %c0_97 = arith.constant 0 : index
    %c0_98 = arith.constant 0 : index
    %c0_99 = arith.constant 0 : index
    %216 = vector.load %arg8[%c0_97, %c0_98, %c0_99] : memref<1x1x48xf32, #tpu.memory_space<vmem>>, vector<1x1x48xf32>
    %217 = vector.shape_cast %216 : vector<1x1x48xf32> to vector<1x48xf32>
    %218 = vector.broadcast %217 : vector<1x48xf32> to vector<8x48xf32>
    %219 = arith.addf %215, %218 : vector<8x48xf32>
    %220 = vector.extract_strided_slice %211 {offsets = [0, 0], sizes = [8, 16], strides = [1, 1]} : vector<8x48xf32> to vector<8x16xf32>
    %221 = vector.extract_strided_slice %219 {offsets = [0, 0], sizes = [8, 16], strides = [1, 1]} : vector<8x48xf32> to vector<8x16xf32>
    %222 = arith.addf %220, %221 : vector<8x16xf32>
    %223 = arith.negf %222 : vector<8x16xf32>
    %224 = math.exp %223 : vector<8x16xf32>
    %cst_100 = arith.constant 1.000000e+00 : f32
    %225 = vector.broadcast %cst_100 : f32 to vector<8x16xf32>
    %226 = arith.addf %225, %224 : vector<8x16xf32>
    %227 = arith.divf %225, %226 : vector<8x16xf32>
    %228 = vector.extract_strided_slice %211 {offsets = [0, 16], sizes = [8, 16], strides = [1, 1]} : vector<8x48xf32> to vector<8x16xf32>
    %229 = vector.extract_strided_slice %219 {offsets = [0, 16], sizes = [8, 16], strides = [1, 1]} : vector<8x48xf32> to vector<8x16xf32>
    %230 = arith.addf %228, %229 : vector<8x16xf32>
    %231 = arith.negf %230 : vector<8x16xf32>
    %232 = math.exp %231 : vector<8x16xf32>
    %cst_101 = arith.constant 1.000000e+00 : f32
    %233 = vector.broadcast %cst_101 : f32 to vector<8x16xf32>
    %234 = arith.addf %233, %232 : vector<8x16xf32>
    %235 = arith.divf %233, %234 : vector<8x16xf32>
    %236 = vector.extract_strided_slice %211 {offsets = [0, 32], sizes = [8, 16], strides = [1, 1]} : vector<8x48xf32> to vector<8x16xf32>
    %237 = vector.extract_strided_slice %219 {offsets = [0, 32], sizes = [8, 16], strides = [1, 1]} : vector<8x48xf32> to vector<8x16xf32>
    %238 = arith.mulf %227, %237 : vector<8x16xf32>
    %239 = arith.addf %236, %238 : vector<8x16xf32>
    %240 = math.tanh %239 : vector<8x16xf32>
    %cst_102 = arith.constant 1.000000e+00 : f32
    %241 = vector.broadcast %cst_102 : f32 to vector<8x16xf32>
    %242 = arith.subf %241, %235 : vector<8x16xf32>
    %243 = arith.mulf %242, %240 : vector<8x16xf32>
    %244 = arith.mulf %235, %199 : vector<8x16xf32>
    %245 = arith.addf %243, %244 : vector<8x16xf32>
    %246 = arith.truncf %245 : vector<8x16xf32> to vector<8x16xbf16>
    %c0_103 = arith.constant 0 : index
    %247 = arith.index_cast %208 : i32 to index
    %c0_104 = arith.constant 0 : index
    %c0_105 = arith.constant 0 : index
    %248 = vector.load %arg9[%c0_103, %247, %c0_104, %c0_105] : memref<1x8x8x16xbf16, #tpu.memory_space<vmem>>, vector<1x1x8x16xbf16>
    %249 = vector.shape_cast %248 : vector<1x1x8x16xbf16> to vector<8x16xbf16>
    %250 = vector.shape_cast %246 : vector<8x16xbf16> to vector<1x1x8x16xbf16>
    tpu.vector_store %arg9[%c0_103, %247, %c0_104, %c0_105], %250 {strides = array<i32>} : memref<1x8x8x16xbf16, #tpu.memory_space<vmem>>, vector<1x1x8x16xbf16>,
    %c5_i32 = arith.constant 5 : i32
    %c2_i32_106 = arith.constant 2 : i32
    %251 = arith.muli %c2_i32_106, %c5_i32 : i32
    %c7_i32_107 = arith.constant 7 : i32
    %252 = arith.subi %c7_i32_107, %251 : i32
    %253 = arith.muli %arg0, %252 : i32
    %254 = arith.addi %c5_i32, %253 : i32
    %255 = arith.index_cast %254 : i32 to index
    %c0_108 = arith.constant 0 : index
    %c0_109 = arith.constant 0 : index
    %256 = vector.load %arg10[%255, %c0_108, %c0_109] : memref<8x8x48xf32, #tpu.memory_space<vmem>>, vector<1x8x48xf32>
    %257 = vector.shape_cast %256 : vector<1x8x48xf32> to vector<8x48xf32>
    %258 = arith.truncf %245 : vector<8x16xf32> to vector<8x16xbf16>
    %c0_110 = arith.constant 0 : index
    %c0_111 = arith.constant 0 : index
    %c0_112 = arith.constant 0 : index
    %259 = vector.load %arg7[%c0_110, %c0_111, %c0_112] : memref<1x16x48xbf16, #tpu.memory_space<vmem>>, vector<1x16x48xbf16>
    %260 = vector.shape_cast %259 : vector<1x16x48xbf16> to vector<16x48xbf16>
    %cst_113 = arith.constant dense<0.000000e+00> : vector<8x48xf32>
    %261 = tpu.matmul %258, %260, %cst_113 {dimension_numbers = #tpu.dot_dimension_numbers<[1], [0], [0], [1], [0, 0, 1, 1], [], []>} : vector<8x16xbf16>, vector<16x48xbf16>, vector<8x48xf32> -> vector<8x48xf32>
    %c0_114 = arith.constant 0 : index
    %c0_115 = arith.constant 0 : index
    %c0_116 = arith.constant 0 : index
    %262 = vector.load %arg8[%c0_114, %c0_115, %c0_116] : memref<1x1x48xf32, #tpu.memory_space<vmem>>, vector<1x1x48xf32>
    %263 = vector.shape_cast %262 : vector<1x1x48xf32> to vector<1x48xf32>
    %264 = vector.broadcast %263 : vector<1x48xf32> to vector<8x48xf32>
    %265 = arith.addf %261, %264 : vector<8x48xf32>
    %266 = vector.extract_strided_slice %257 {offsets = [0, 0], sizes = [8, 16], strides = [1, 1]} : vector<8x48xf32> to vector<8x16xf32>
    %267 = vector.extract_strided_slice %265 {offsets = [0, 0], sizes = [8, 16], strides = [1, 1]} : vector<8x48xf32> to vector<8x16xf32>
    %268 = arith.addf %266, %267 : vector<8x16xf32>
    %269 = arith.negf %268 : vector<8x16xf32>
    %270 = math.exp %269 : vector<8x16xf32>
    %cst_117 = arith.constant 1.000000e+00 : f32
    %271 = vector.broadcast %cst_117 : f32 to vector<8x16xf32>
    %272 = arith.addf %271, %270 : vector<8x16xf32>
    %273 = arith.divf %271, %272 : vector<8x16xf32>
    %274 = vector.extract_strided_slice %257 {offsets = [0, 16], sizes = [8, 16], strides = [1, 1]} : vector<8x48xf32> to vector<8x16xf32>
    %275 = vector.extract_strided_slice %265 {offsets = [0, 16], sizes = [8, 16], strides = [1, 1]} : vector<8x48xf32> to vector<8x16xf32>
    %276 = arith.addf %274, %275 : vector<8x16xf32>
    %277 = arith.negf %276 : vector<8x16xf32>
    %278 = math.exp %277 : vector<8x16xf32>
    %cst_118 = arith.constant 1.000000e+00 : f32
    %279 = vector.broadcast %cst_118 : f32 to vector<8x16xf32>
    %280 = arith.addf %279, %278 : vector<8x16xf32>
    %281 = arith.divf %279, %280 : vector<8x16xf32>
    %282 = vector.extract_strided_slice %257 {offsets = [0, 32], sizes = [8, 16], strides = [1, 1]} : vector<8x48xf32> to vector<8x16xf32>
    %283 = vector.extract_strided_slice %265 {offsets = [0, 32], sizes = [8, 16], strides = [1, 1]} : vector<8x48xf32> to vector<8x16xf32>
    %284 = arith.mulf %273, %283 : vector<8x16xf32>
    %285 = arith.addf %282, %284 : vector<8x16xf32>
    %286 = math.tanh %285 : vector<8x16xf32>
    %cst_119 = arith.constant 1.000000e+00 : f32
    %287 = vector.broadcast %cst_119 : f32 to vector<8x16xf32>
    %288 = arith.subf %287, %281 : vector<8x16xf32>
    %289 = arith.mulf %288, %286 : vector<8x16xf32>
    %290 = arith.mulf %281, %245 : vector<8x16xf32>
    %291 = arith.addf %289, %290 : vector<8x16xf32>
    %292 = arith.truncf %291 : vector<8x16xf32> to vector<8x16xbf16>
    %c0_120 = arith.constant 0 : index
    %293 = arith.index_cast %254 : i32 to index
    %c0_121 = arith.constant 0 : index
    %c0_122 = arith.constant 0 : index
    %294 = vector.load %arg9[%c0_120, %293, %c0_121, %c0_122] : memref<1x8x8x16xbf16, #tpu.memory_space<vmem>>, vector<1x1x8x16xbf16>
    %295 = vector.shape_cast %294 : vector<1x1x8x16xbf16> to vector<8x16xbf16>
    %296 = vector.shape_cast %292 : vector<8x16xbf16> to vector<1x1x8x16xbf16>
    tpu.vector_store %arg9[%c0_120, %293, %c0_121, %c0_122], %296 {strides = array<i32>} : memref<1x8x8x16xbf16, #tpu.memory_space<vmem>>, vector<1x1x8x16xbf16>,
    %c6_i32 = arith.constant 6 : i32
    %c2_i32_123 = arith.constant 2 : i32
    %297 = arith.muli %c2_i32_123, %c6_i32 : i32
    %c7_i32_124 = arith.constant 7 : i32
    %298 = arith.subi %c7_i32_124, %297 : i32
    %299 = arith.muli %arg0, %298 : i32
    %300 = arith.addi %c6_i32, %299 : i32
    %301 = arith.index_cast %300 : i32 to index
    %c0_125 = arith.constant 0 : index
    %c0_126 = arith.constant 0 : index
    %302 = vector.load %arg10[%301, %c0_125, %c0_126] : memref<8x8x48xf32, #tpu.memory_space<vmem>>, vector<1x8x48xf32>
    %303 = vector.shape_cast %302 : vector<1x8x48xf32> to vector<8x48xf32>
    %304 = arith.truncf %291 : vector<8x16xf32> to vector<8x16xbf16>
    %c0_127 = arith.constant 0 : index
    %c0_128 = arith.constant 0 : index
    %c0_129 = arith.constant 0 : index
    %305 = vector.load %arg7[%c0_127, %c0_128, %c0_129] : memref<1x16x48xbf16, #tpu.memory_space<vmem>>, vector<1x16x48xbf16>
    %306 = vector.shape_cast %305 : vector<1x16x48xbf16> to vector<16x48xbf16>
    %cst_130 = arith.constant dense<0.000000e+00> : vector<8x48xf32>
    %307 = tpu.matmul %304, %306, %cst_130 {dimension_numbers = #tpu.dot_dimension_numbers<[1], [0], [0], [1], [0, 0, 1, 1], [], []>} : vector<8x16xbf16>, vector<16x48xbf16>, vector<8x48xf32> -> vector<8x48xf32>
    %c0_131 = arith.constant 0 : index
    %c0_132 = arith.constant 0 : index
    %c0_133 = arith.constant 0 : index
    %308 = vector.load %arg8[%c0_131, %c0_132, %c0_133] : memref<1x1x48xf32, #tpu.memory_space<vmem>>, vector<1x1x48xf32>
    %309 = vector.shape_cast %308 : vector<1x1x48xf32> to vector<1x48xf32>
    %310 = vector.broadcast %309 : vector<1x48xf32> to vector<8x48xf32>
    %311 = arith.addf %307, %310 : vector<8x48xf32>
    %312 = vector.extract_strided_slice %303 {offsets = [0, 0], sizes = [8, 16], strides = [1, 1]} : vector<8x48xf32> to vector<8x16xf32>
    %313 = vector.extract_strided_slice %311 {offsets = [0, 0], sizes = [8, 16], strides = [1, 1]} : vector<8x48xf32> to vector<8x16xf32>
    %314 = arith.addf %312, %313 : vector<8x16xf32>
    %315 = arith.negf %314 : vector<8x16xf32>
    %316 = math.exp %315 : vector<8x16xf32>
    %cst_134 = arith.constant 1.000000e+00 : f32
    %317 = vector.broadcast %cst_134 : f32 to vector<8x16xf32>
    %318 = arith.addf %317, %316 : vector<8x16xf32>
    %319 = arith.divf %317, %318 : vector<8x16xf32>
    %320 = vector.extract_strided_slice %303 {offsets = [0, 16], sizes = [8, 16], strides = [1, 1]} : vector<8x48xf32> to vector<8x16xf32>
    %321 = vector.extract_strided_slice %311 {offsets = [0, 16], sizes = [8, 16], strides = [1, 1]} : vector<8x48xf32> to vector<8x16xf32>
    %322 = arith.addf %320, %321 : vector<8x16xf32>
    %323 = arith.negf %322 : vector<8x16xf32>
    %324 = math.exp %323 : vector<8x16xf32>
    %cst_135 = arith.constant 1.000000e+00 : f32
    %325 = vector.broadcast %cst_135 : f32 to vector<8x16xf32>
    %326 = arith.addf %325, %324 : vector<8x16xf32>
    %327 = arith.divf %325, %326 : vector<8x16xf32>
    %328 = vector.extract_strided_slice %303 {offsets = [0, 32], sizes = [8, 16], strides = [1, 1]} : vector<8x48xf32> to vector<8x16xf32>
    %329 = vector.extract_strided_slice %311 {offsets = [0, 32], sizes = [8, 16], strides = [1, 1]} : vector<8x48xf32> to vector<8x16xf32>
    %330 = arith.mulf %319, %329 : vector<8x16xf32>
    %331 = arith.addf %328, %330 : vector<8x16xf32>
    %332 = math.tanh %331 : vector<8x16xf32>
    %cst_136 = arith.constant 1.000000e+00 : f32
    %333 = vector.broadcast %cst_136 : f32 to vector<8x16xf32>
    %334 = arith.subf %333, %327 : vector<8x16xf32>
    %335 = arith.mulf %334, %332 : vector<8x16xf32>
    %336 = arith.mulf %327, %291 : vector<8x16xf32>
    %337 = arith.addf %335, %336 : vector<8x16xf32>
    %338 = arith.truncf %337 : vector<8x16xf32> to vector<8x16xbf16>
    %c0_137 = arith.constant 0 : index
    %339 = arith.index_cast %300 : i32 to index
    %c0_138 = arith.constant 0 : index
    %c0_139 = arith.constant 0 : index
    %340 = vector.load %arg9[%c0_137, %339, %c0_138, %c0_139] : memref<1x8x8x16xbf16, #tpu.memory_space<vmem>>, vector<1x1x8x16xbf16>
    %341 = vector.shape_cast %340 : vector<1x1x8x16xbf16> to vector<8x16xbf16>
    %342 = vector.shape_cast %338 : vector<8x16xbf16> to vector<1x1x8x16xbf16>
    tpu.vector_store %arg9[%c0_137, %339, %c0_138, %c0_139], %342 {strides = array<i32>} : memref<1x8x8x16xbf16, #tpu.memory_space<vmem>>, vector<1x1x8x16xbf16>,
    %c7_i32_140 = arith.constant 7 : i32
    %c2_i32_141 = arith.constant 2 : i32
    %343 = arith.muli %c2_i32_141, %c7_i32_140 : i32
    %c7_i32_142 = arith.constant 7 : i32
    %344 = arith.subi %c7_i32_142, %343 : i32
    %345 = arith.muli %arg0, %344 : i32
    %346 = arith.addi %c7_i32_140, %345 : i32
    %347 = arith.index_cast %346 : i32 to index
    %c0_143 = arith.constant 0 : index
    %c0_144 = arith.constant 0 : index
    %348 = vector.load %arg10[%347, %c0_143, %c0_144] : memref<8x8x48xf32, #tpu.memory_space<vmem>>, vector<1x8x48xf32>
    %349 = vector.shape_cast %348 : vector<1x8x48xf32> to vector<8x48xf32>
    %350 = arith.truncf %337 : vector<8x16xf32> to vector<8x16xbf16>
    %c0_145 = arith.constant 0 : index
    %c0_146 = arith.constant 0 : index
    %c0_147 = arith.constant 0 : index
    %351 = vector.load %arg7[%c0_145, %c0_146, %c0_147] : memref<1x16x48xbf16, #tpu.memory_space<vmem>>, vector<1x16x48xbf16>
    %352 = vector.shape_cast %351 : vector<1x16x48xbf16> to vector<16x48xbf16>
    %cst_148 = arith.constant dense<0.000000e+00> : vector<8x48xf32>
    %353 = tpu.matmul %350, %352, %cst_148 {dimension_numbers = #tpu.dot_dimension_numbers<[1], [0], [0], [1], [0, 0, 1, 1], [], []>} : vector<8x16xbf16>, vector<16x48xbf16>, vector<8x48xf32> -> vector<8x48xf32>
    %c0_149 = arith.constant 0 : index
    %c0_150 = arith.constant 0 : index
    %c0_151 = arith.constant 0 : index
    %354 = vector.load %arg8[%c0_149, %c0_150, %c0_151] : memref<1x1x48xf32, #tpu.memory_space<vmem>>, vector<1x1x48xf32>
    %355 = vector.shape_cast %354 : vector<1x1x48xf32> to vector<1x48xf32>
    %356 = vector.broadcast %355 : vector<1x48xf32> to vector<8x48xf32>
    %357 = arith.addf %353, %356 : vector<8x48xf32>
    %358 = vector.extract_strided_slice %349 {offsets = [0, 0], sizes = [8, 16], strides = [1, 1]} : vector<8x48xf32> to vector<8x16xf32>
    %359 = vector.extract_strided_slice %357 {offsets = [0, 0], sizes = [8, 16], strides = [1, 1]} : vector<8x48xf32> to vector<8x16xf32>
    %360 = arith.addf %358, %359 : vector<8x16xf32>
    %361 = arith.negf %360 : vector<8x16xf32>
    %362 = math.exp %361 : vector<8x16xf32>
    %cst_152 = arith.constant 1.000000e+00 : f32
    %363 = vector.broadcast %cst_152 : f32 to vector<8x16xf32>
    %364 = arith.addf %363, %362 : vector<8x16xf32>
    %365 = arith.divf %363, %364 : vector<8x16xf32>
    %366 = vector.extract_strided_slice %349 {offsets = [0, 16], sizes = [8, 16], strides = [1, 1]} : vector<8x48xf32> to vector<8x16xf32>
    %367 = vector.extract_strided_slice %357 {offsets = [0, 16], sizes = [8, 16], strides = [1, 1]} : vector<8x48xf32> to vector<8x16xf32>
    %368 = arith.addf %366, %367 : vector<8x16xf32>
    %369 = arith.negf %368 : vector<8x16xf32>
    %370 = math.exp %369 : vector<8x16xf32>
    %cst_153 = arith.constant 1.000000e+00 : f32
    %371 = vector.broadcast %cst_153 : f32 to vector<8x16xf32>
    %372 = arith.addf %371, %370 : vector<8x16xf32>
    %373 = arith.divf %371, %372 : vector<8x16xf32>
    %374 = vector.extract_strided_slice %349 {offsets = [0, 32], sizes = [8, 16], strides = [1, 1]} : vector<8x48xf32> to vector<8x16xf32>
    %375 = vector.extract_strided_slice %357 {offsets = [0, 32], sizes = [8, 16], strides = [1, 1]} : vector<8x48xf32> to vector<8x16xf32>
    %376 = arith.mulf %365, %375 : vector<8x16xf32>
    %377 = arith.addf %374, %376 : vector<8x16xf32>
    %378 = math.tanh %377 : vector<8x16xf32>
    %cst_154 = arith.constant 1.000000e+00 : f32
    %379 = vector.broadcast %cst_154 : f32 to vector<8x16xf32>
    %380 = arith.subf %379, %373 : vector<8x16xf32>
    %381 = arith.mulf %380, %378 : vector<8x16xf32>
    %382 = arith.mulf %373, %337 : vector<8x16xf32>
    %383 = arith.addf %381, %382 : vector<8x16xf32>
    %384 = arith.truncf %383 : vector<8x16xf32> to vector<8x16xbf16>
    %c0_155 = arith.constant 0 : index
    %385 = arith.index_cast %346 : i32 to index
    %c0_156 = arith.constant 0 : index
    %c0_157 = arith.constant 0 : index
    %386 = vector.load %arg9[%c0_155, %385, %c0_156, %c0_157] : memref<1x8x8x16xbf16, #tpu.memory_space<vmem>>, vector<1x1x8x16xbf16>
    %387 = vector.shape_cast %386 : vector<1x1x8x16xbf16> to vector<8x16xbf16>
    %388 = vector.shape_cast %384 : vector<8x16xbf16> to vector<1x1x8x16xbf16>
    tpu.vector_store %arg9[%c0_155, %385, %c0_156, %c0_157], %388 {strides = array<i32>} : memref<1x8x8x16xbf16, #tpu.memory_space<vmem>>, vector<1x1x8x16xbf16>,
    %c8_i32 = arith.constant 8 : i32
    %c0_158 = arith.constant 0 : index
    %c0_159 = arith.constant 0 : index
    %389 = vector.load %arg11[%c0_158, %c0_159] : memref<8x16xf32, #tpu.memory_space<vmem>>, vector<8x16xf32>
    tpu.vector_store %arg11[%c0_158, %c0_159], %383 {strides = array<i32>} : memref<8x16xf32, #tpu.memory_space<vmem>>, vector<8x16xf32>,
    return
  }
  func.func @transform_0(%arg0: i32, %arg1: i32) -> (i32, i32, i32) {
    %c2_i32 = arith.constant 2 : i32
    %0 = arith.muli %c2_i32, %arg1 : i32
    %c0_i32 = arith.constant 0 : i32
    %1 = arith.subi %c0_i32, %0 : i32
    %2 = arith.muli %arg0, %1 : i32
    %3 = arith.addi %arg1, %2 : i32
    %c0_i32_0 = arith.constant 0 : i32
    %c0_i32_1 = arith.constant 0 : i32
    %c0_i32_2 = arith.constant 0 : i32
    return %3, %c0_i32_0, %c0_i32_1 : i32, i32, i32
  }
  func.func @transform_1(%arg0: i32, %arg1: i32) -> (i32, i32, i32) {
    %c2_i32 = arith.constant 2 : i32
    %0 = arith.muli %c2_i32, %arg1 : i32
    %c0_i32 = arith.constant 0 : i32
    %1 = arith.subi %c0_i32, %0 : i32
    %2 = arith.muli %arg0, %1 : i32
    %3 = arith.addi %arg1, %2 : i32
    %c0_i32_0 = arith.constant 0 : i32
    %c0_i32_1 = arith.constant 0 : i32
    %c0_i32_2 = arith.constant 0 : i32
    return %3, %c0_i32_0, %c0_i32_1 : i32, i32, i32
  }
  func.func @transform_2(%arg0: i32, %arg1: i32) -> (i32, i32, i32) {
    %c0_i32 = arith.constant 0 : i32
    %c0_i32_0 = arith.constant 0 : i32
    %c0_i32_1 = arith.constant 0 : i32
    return %arg0, %c0_i32, %c0_i32_0 : i32, i32, i32
  }
  func.func @transform_3(%arg0: i32, %arg1: i32) -> (i32, i32, i32) {
    %c0_i32 = arith.constant 0 : i32
    %c0_i32_0 = arith.constant 0 : i32
    %c0_i32_1 = arith.constant 0 : i32
    return %arg0, %c0_i32, %c0_i32_0 : i32, i32, i32
  }
  func.func @transform_4(%arg0: i32, %arg1: i32) -> (i32, i32, i32) {
    %c0_i32 = arith.constant 0 : i32
    %c0_i32_0 = arith.constant 0 : i32
    %c0_i32_1 = arith.constant 0 : i32
    return %arg0, %c0_i32, %c0_i32_0 : i32, i32, i32
  }
  func.func @transform_5(%arg0: i32, %arg1: i32) -> (i32, i32, i32) {
    %c0_i32 = arith.constant 0 : i32
    %c0_i32_0 = arith.constant 0 : i32
    %c0_i32_1 = arith.constant 0 : i32
    return %arg0, %c0_i32, %c0_i32_0 : i32, i32, i32
  }
  func.func @transform_6(%arg0: i32, %arg1: i32) -> (i32, i32, i32) {
    %c0_i32 = arith.constant 0 : i32
    %c0_i32_0 = arith.constant 0 : i32
    %c0_i32_1 = arith.constant 0 : i32
    return %arg0, %c0_i32, %c0_i32_0 : i32, i32, i32
  }
  func.func @transform_7(%arg0: i32, %arg1: i32) -> (i32, i32, i32, i32) {
    %c2_i32 = arith.constant 2 : i32
    %0 = arith.muli %c2_i32, %arg1 : i32
    %c0_i32 = arith.constant 0 : i32
    %1 = arith.subi %c0_i32, %0 : i32
    %2 = arith.muli %arg0, %1 : i32
    %3 = arith.addi %arg1, %2 : i32
    %c0_i32_0 = arith.constant 0 : i32
    %c0_i32_1 = arith.constant 0 : i32
    %c0_i32_2 = arith.constant 0 : i32
    return %arg0, %3, %c0_i32_0, %c0_i32_1 : i32, i32, i32, i32
  }
}

</mosaic_0001>

<llo_original>
// kernel: tpu_custom_call.1
$region0: #{tpu_custom_call.1}
  #allocation0 [shape = 'u32[]', space=smem, size = 0x4, offset = 0x4, fixed_abs, tag = 'smem constant byte address 0x4 - core index']
  #allocation1 [shape = 'u32[144,128]{1,0:T(1,128)}', space=vmem, size = 0x12000, scoped, tag = 'internal scratch']
  #allocation2 [shape = 'f32[8,8,48]{2,1,0:T(8,128)}', space=vmem, size = 0x8000, scoped, tag = 'scratch operand']
  #allocation3 [shape = 'f32[8,16]{1,0:T(8,128)}', space=vmem, size = 0x1000, scoped, tag = 'scratch operand']
  %s0 = inlined_call_operand.hbm [shape: bf16[8,8,32], index: 0, kind: input, shape index: {}]
  %s1 = inlined_call_operand.hbm [shape: bf16[8,8,32], index: 1, kind: input, shape index: {}]
  %s2 = inlined_call_operand.hbm [shape: bf16[2,32,48], index: 2, kind: input, shape index: {}]
  %s3 = inlined_call_operand.hbm [shape: bf16[2,32,48], index: 3, kind: input, shape index: {}]
  %s4 = inlined_call_operand.vmem [shape: f32[2,1,48], index: 4, kind: input, shape index: {}]
  %s5 = inlined_call_operand.hbm [shape: bf16[2,16,48], index: 5, kind: input, shape index: {}]
  %s6 = inlined_call_operand.vmem [shape: f32[2,1,48], index: 6, kind: input, shape index: {}]
  %s7 = inlined_call_operand.hbm [shape: bf16[2,8,8,16], index: 7, kind: output, shape index: {}]
  %s8 = sld [smem:[#allocation0]]
  $region85: #{tpu_custom_call.1} parent=0
    _
  %s10 = ssub.s32 1, %s8
  %s11 = scalar_select 0, %s10, %s8
  $region1: #{tpu_custom_call.1} parent=0
    #allocation4 [shape = 'u8[32768]{0}', space=vmem, size = 0x8000, scoped, tag = 'input window, operand 0']
    #allocation5 [shape = 's32[2]{0}', space=sflag, size = 0x8, scoped, tag = 'scoped memory for tpu_custom_call.1']
    #allocation6 [shape = 's32[2]{0}', space=sflag, size = 0x8, scoped, tag = 'scoped memory for tpu_custom_call.1']
    #allocation7 [shape = 'u8[32768]{0}', space=vmem, size = 0x8000, scoped, tag = 'input window, operand 1']
    #allocation8 [shape = 's32[2]{0}', space=sflag, size = 0x8, scoped, tag = 'scoped memory for tpu_custom_call.1']
    #allocation9 [shape = 'u8[16384]{0}', space=vmem, size = 0x4000, scoped, tag = 'input window, operand 2']
    #allocation10 [shape = 'u8[16384]{0}', space=vmem, size = 0x4000, scoped, tag = 'input window, operand 3']
    #allocation11 [shape = 's32[2]{0}', space=sflag, size = 0x8, scoped, tag = 'scoped memory for tpu_custom_call.1']
    #allocation12 [shape = 'u8[8192]{0}', space=vmem, size = 0x2000, scoped, tag = 'input window, operand 5']
    #allocation13 [shape = 'u8[32768]{0}', space=vmem, size = 0x8000, scoped, tag = 'output window, operand 0']
    %12 = vsyncpa [#allocation5], 0
    %s13 = scalar_lea.sflag [#allocation5], 1
    %14 = vsyncpa %s13, 0
    %15 = vsyncpa [#allocation8], 0
    %s16 = scalar_lea.sflag [#allocation8], 1
    %17 = vsyncpa %s16, 0
    %18 = vsyncpa [#allocation11], 0
    %s19 = scalar_lea.sflag [#allocation11], 1
    %20 = vsyncpa %s19, 0
    %21 = vsyncpa [#allocation6], 0
    %s22 = scalar_lea.sflag [#allocation6], 1
    %23 = vsyncpa %s22, 0
    loop: start=0, step=1, limit=4
    $region2: #{tpu_custom_call.1} parent=1 // loop_pre_header
      _
    $region3: #{tpu_custom_call.1} parent=1 // loop_header
      %s25 = sphi 0, %s29
      %p26 = scmp.ge.s32.totalorder %s25, 4
      %s32 = sphi 0, %s44
      %s33 = sphi 0, %s40
      %s34 = sphi 0, %s32
      %s35 = sphi 0, %s33
      %s36 = sphi 0, %s34
      %s37 = sphi 0, %s35
      %s55 = sphi 0, %s57
      %s58 = sphi 0, %s55
      %s59 = sphi 0, %s58
      %s75 = sphi 0, %s59
      %s89 = sphi 0, %s91
      %s92 = sphi 0, %s89
      %s93 = sphi 0, %s92
      %s109 = sphi 0, %s93
      %s115 = sphi 0, %s117
      %s118 = sphi 0, %s115
      %s119 = sphi 0, %s118
      %s135 = sphi 0, %s119
      %s141 = sphi 0, %s143
      %s144 = sphi 0, %s141
      %s145 = sphi 0, %s144
      %s161 = sphi 0, %s145
      %s167 = sphi 0, %s169
      %s170 = sphi 0, %s167
      %s171 = sphi 0, %s170
      %s187 = sphi 0, %s171
      %s193 = sphi 0, %s195
      %s196 = sphi 0, %s193
      %s197 = sphi 0, %s196
      %s213 = sphi 0, %s197
      %s219 = sphi 0, %s221
      %s222 = sphi 0, %s219
      %s223 = sphi 0, %s222
      %s239 = sphi 0, %s223
      %s255 = sphi 0, %s257
      %s258 = sphi 0, %s255
      %s259 = sphi 0, %s258
      %s275 = sphi 0, %s259
    $region4: #{tpu_custom_call.1} parent=1 // loop_header_branch
      %28 = sbr.rel (%p26) target = $region8
    $region5: #{tpu_custom_call.1} parent=1 // loop_body
      %s30 = ssub.s32 %s25, 1
      %s31 = ssub.s32 %s25, 2
      %s38 = sadd.s32 1, %s33
      %p39 = scmp.ge.s32.totalorder %s38, 1
      %s40 = scalar_select %p39, 0, %s38
      %s41 = sadd.s32 1, %s32
      %s42 = scalar_select %p39, %s41, %s32
      %p43 = scmp.ge.s32.totalorder %s42, 2
      %s44 = scalar_select %p43, 0, %s42
      %s45 = smul.u32 %s33, 2
      %s46 = ssub.s32 0, %s45
      %s47 = smul.u32 %s32, %s46
      %s48 = sadd.s32 %s33, %s47
      %s49 = smul.u32 %s40, 2
      %s50 = ssub.s32 0, %s49
      %s51 = smul.u32 %s44, %s50
      %s52 = sadd.s32 %s40, %s51
      %s53 = ssub.s32 %s48, %s52
      %p54 = scmp.eq.s32.totalorder %s53, 0
      %s56 = sadd.s32 %s55, 1
      %s57 = scalar_select %p54, %s55, %s56
      %p60 = pneg %p54
      %p61 = scmp.eq.s32.totalorder %s25, 1
      %p62 = por %p60, %p61
      %p63 = scmp.ne.s32.totalorder %s55, %s58
      %p64 = scmp.eq.s32.totalorder %s25, 0
      %p65 = por %p63, %p64
      %p66 = scmp.ne.s32.totalorder %s55, %s58
      %p67 = scmp.eq.s32.totalorder %s30, 1
      %p68 = por %p66, %p67
      %p69 = scmp.ne.s32.totalorder %s58, %s59
      %p70 = scmp.eq.s32.totalorder %s30, 0
      %p71 = por %p69, %p70
      %p72 = scmp.ne.s32.totalorder %s58, %s59
      %p73 = scmp.eq.s32.totalorder %s31, 1
      %p74 = por %p72, %p73
      %p76 = scmp.ne.s32.totalorder %s59, %s75
      %p77 = scmp.eq.s32.totalorder %s31, 0
      %p78 = por %p76, %p77
      %s79 = smul.u32 %s33, 2
      %s80 = ssub.s32 0, %s79
      %s81 = smul.u32 %s32, %s80
      %s82 = sadd.s32 %s33, %s81
      %s83 = smul.u32 %s40, 2
      %s84 = ssub.s32 0, %s83
      %s85 = smul.u32 %s44, %s84
      %s86 = sadd.s32 %s40, %s85
      %s87 = ssub.s32 %s82, %s86
      %p88 = scmp.eq.s32.totalorder %s87, 0
      %s90 = sadd.s32 %s89, 1
      %s91 = scalar_select %p88, %s89, %s90
      %p94 = pneg %p88
      %p95 = scmp.eq.s32.totalorder %s25, 1
      %p96 = por %p94, %p95
      %p97 = scmp.ne.s32.totalorder %s89, %s92
      %p98 = scmp.eq.s32.totalorder %s25, 0
      %p99 = por %p97, %p98
      %p100 = scmp.ne.s32.totalorder %s89, %s92
      %p101 = scmp.eq.s32.totalorder %s30, 1
      %p102 = por %p100, %p101
      %p103 = scmp.ne.s32.totalorder %s92, %s93
      %p104 = scmp.eq.s32.totalorder %s30, 0
      %p105 = por %p103, %p104
      %p106 = scmp.ne.s32.totalorder %s92, %s93
      %p107 = scmp.eq.s32.totalorder %s31, 1
      %p108 = por %p106, %p107
      %p110 = scmp.ne.s32.totalorder %s93, %s109
      %p111 = scmp.eq.s32.totalorder %s31, 0
      %p112 = por %p110, %p111
      %s113 = ssub.s32 %s32, %s44
      %p114 = scmp.eq.s32.totalorder %s113, 0
      %s116 = sadd.s32 %s115, 1
      %s117 = scalar_select %p114, %s115, %s116
      %p120 = pneg %p114
      %p121 = scmp.eq.s32.totalorder %s25, 1
      %p122 = por %p120, %p121
      %p123 = scmp.ne.s32.totalorder %s115, %s118
      %p124 = scmp.eq.s32.totalorder %s25, 0
      %p125 = por %p123, %p124
      %p126 = scmp.ne.s32.totalorder %s115, %s118
      %p127 = scmp.eq.s32.totalorder %s30, 1
      %p128 = por %p126, %p127
      %p129 = scmp.ne.s32.totalorder %s118, %s119
      %p130 = scmp.eq.s32.totalorder %s30, 0
      %p131 = por %p129, %p130
      %p132 = scmp.ne.s32.totalorder %s118, %s119
      %p133 = scmp.eq.s32.totalorder %s31, 1
      %p134 = por %p132, %p133
      %p136 = scmp.ne.s32.totalorder %s119, %s135
      %p137 = scmp.eq.s32.totalorder %s31, 0
      %p138 = por %p136, %p137
      %s139 = ssub.s32 %s32, %s44
      %p140 = scmp.eq.s32.totalorder %s139, 0
      %s142 = sadd.s32 %s141, 1
      %s143 = scalar_select %p140, %s141, %s142
      %p146 = pneg %p140
      %p147 = scmp.eq.s32.totalorder %s25, 1
      %p148 = por %p146, %p147
      %p149 = scmp.ne.s32.totalorder %s141, %s144
      %p150 = scmp.eq.s32.totalorder %s25, 0
      %p151 = por %p149, %p150
      %p152 = scmp.ne.s32.totalorder %s141, %s144
      %p153 = scmp.eq.s32.totalorder %s30, 1
      %p154 = por %p152, %p153
      %p155 = scmp.ne.s32.totalorder %s144, %s145
      %p156 = scmp.eq.s32.totalorder %s30, 0
      %p157 = por %p155, %p156
      %p158 = scmp.ne.s32.totalorder %s144, %s145
      %p159 = scmp.eq.s32.totalorder %s31, 1
      %p160 = por %p158, %p159
      %p162 = scmp.ne.s32.totalorder %s145, %s161
      %p163 = scmp.eq.s32.totalorder %s31, 0
      %p164 = por %p162, %p163
      %s165 = ssub.s32 %s32, %s44
      %p166 = scmp.eq.s32.totalorder %s165, 0
      %s168 = sadd.s32 %s167, 1
      %s169 = scalar_select %p166, %s167, %s168
      %p172 = pneg %p166
      %p173 = scmp.eq.s32.totalorder %s25, 1
      %p174 = por %p172, %p173
      %p175 = scmp.ne.s32.totalorder %s167, %s170
      %p176 = scmp.eq.s32.totalorder %s25, 0
      %p177 = por %p175, %p176
      %p178 = scmp.ne.s32.totalorder %s167, %s170
      %p179 = scmp.eq.s32.totalorder %s30, 1
      %p180 = por %p178, %p179
      %p181 = scmp.ne.s32.totalorder %s170, %s171
      %p182 = scmp.eq.s32.totalorder %s30, 0
      %p183 = por %p181, %p182
      %p184 = scmp.ne.s32.totalorder %s170, %s171
      %p185 = scmp.eq.s32.totalorder %s31, 1
      %p186 = por %p184, %p185
      %p188 = scmp.ne.s32.totalorder %s171, %s187
      %p189 = scmp.eq.s32.totalorder %s31, 0
      %p190 = por %p188, %p189
      %s191 = ssub.s32 %s32, %s44
      %p192 = scmp.eq.s32.totalorder %s191, 0
      %s194 = sadd.s32 %s193, 1
      %s195 = scalar_select %p192, %s193, %s194
      %p198 = pneg %p192
      %p199 = scmp.eq.s32.totalorder %s25, 1
      %p200 = por %p198, %p199
      %p201 = scmp.ne.s32.totalorder %s193, %s196
      %p202 = scmp.eq.s32.totalorder %s25, 0
      %p203 = por %p201, %p202
      %p204 = scmp.ne.s32.totalorder %s193, %s196
      %p205 = scmp.eq.s32.totalorder %s30, 1
      %p206 = por %p204, %p205
      %p207 = scmp.ne.s32.totalorder %s196, %s197
      %p208 = scmp.eq.s32.totalorder %s30, 0
      %p209 = por %p207, %p208
      %p210 = scmp.ne.s32.totalorder %s196, %s197
      %p211 = scmp.eq.s32.totalorder %s31, 1
      %p212 = por %p210, %p211
      %p214 = scmp.ne.s32.totalorder %s197, %s213
      %p215 = scmp.eq.s32.totalorder %s31, 0
      %p216 = por %p214, %p215
      %s217 = ssub.s32 %s32, %s44
      %p218 = scmp.eq.s32.totalorder %s217, 0
      %s220 = sadd.s32 %s219, 1
      %s221 = scalar_select %p218, %s219, %s220
      %p224 = pneg %p218
      %p225 = scmp.eq.s32.totalorder %s25, 1
      %p226 = por %p224, %p225
      %p227 = scmp.ne.s32.totalorder %s219, %s222
      %p228 = scmp.eq.s32.totalorder %s25, 0
      %p229 = por %p227, %p228
      %p230 = scmp.ne.s32.totalorder %s219, %s222
      %p231 = scmp.eq.s32.totalorder %s30, 1
      %p232 = por %p230, %p231
      %p233 = scmp.ne.s32.totalorder %s222, %s223
      %p234 = scmp.eq.s32.totalorder %s30, 0
      %p235 = por %p233, %p234
      %p236 = scmp.ne.s32.totalorder %s222, %s223
      %p237 = scmp.eq.s32.totalorder %s31, 1
      %p238 = por %p236, %p237
      %p240 = scmp.ne.s32.totalorder %s223, %s239
      %p241 = scmp.eq.s32.totalorder %s31, 0
      %p242 = por %p240, %p241
      %s243 = smul.u32 %s33, 2
      %s244 = ssub.s32 0, %s243
      %s245 = smul.u32 %s32, %s244
      %s246 = sadd.s32 %s33, %s245
      %s247 = smul.u32 %s40, 2
      %s248 = ssub.s32 0, %s247
      %s249 = smul.u32 %s44, %s248
      %s250 = sadd.s32 %s40, %s249
      %s251 = ssub.s32 %s32, %s44
      %s252 = ssub.s32 %s246, %s250
      %s253 = sor.u32 %s251, %s252
      %p254 = scmp.eq.s32.totalorder %s253, 0
      %s256 = sadd.s32 %s255, 1
      %s257 = scalar_select %p254, %s255, %s256
      %p260 = pneg %p254
      %p261 = scmp.eq.s32.totalorder %s25, 1
      %p262 = por %p260, %p261
      %p263 = scmp.ne.s32.totalorder %s255, %s258
      %p264 = scmp.eq.s32.totalorder %s25, 0
      %p265 = por %p263, %p264
      %p266 = scmp.ne.s32.totalorder %s255, %s258
      %p267 = scmp.eq.s32.totalorder %s30, 1
      %p268 = por %p266, %p267
      %p269 = scmp.ne.s32.totalorder %s258, %s259
      %p270 = scmp.eq.s32.totalorder %s30, 0
      %p271 = por %p269, %p270
      %p272 = scmp.ne.s32.totalorder %s258, %s259
      %p273 = scmp.eq.s32.totalorder %s31, 1
      %p274 = por %p272, %p273
      %p276 = scmp.ne.s32.totalorder %s259, %s275
      %p277 = scmp.eq.s32.totalorder %s31, 0
      %p278 = por %p276, %p277
      %p279 = scmp.le.s32.totalorder 1, %s25
      %p280 = scmp.lt.s32.totalorder %s25, 3
      %p281 = pnand %p279, %p280
      %p282 = pneg %p281
      // Predicated region
      $region9: #{tpu_custom_call.1} parent=5 // pred_check
        _
      $region10: #{tpu_custom_call.1} parent=5 // pred_check_branch
        %284 = sbr.rel (%p281) target = $region12
      $region11: #{tpu_custom_call.1} parent=5 // pred_region
        %s285 = ssub.s32 %s25, 1
      $region12: #{tpu_custom_call.1} parent=5 // pred_fallthru
        _
      %p286 = scmp.lt.s32.totalorder %s25, 2
      // Predicated region
      $region13: #{tpu_custom_call.1} parent=5 // pred_check
        %p287 = pneg %p286
      $region14: #{tpu_custom_call.1} parent=5 // pred_check_branch
        %289 = sbr.rel (%p287) target = $region16
      $region15: #{tpu_custom_call.1} parent=5 // pred_region
        // Predicated region
        $region17: #{tpu_custom_call.1} parent=15 // pred_check
          %p290 = pneg %p65
        $region18: #{tpu_custom_call.1} parent=15 // pred_check_branch
          %292 = sbr.rel (%p290) target = $region20
        $region19: #{tpu_custom_call.1} parent=15 // pred_region
          %s293 = sand.u32 %s55, 1
          %s294 = scalar_lea.sflag [#allocation5], %s293
          %s295 = sand.u32 %s55, 1
          %s296 = smul.addr %s295, 32
          %s297 = scalar_lea.vmem [#allocation4], %s296
          %s298 = smul.u32 %s33, 2
          %s299 = ssub.s32 0, %s298
          %s300 = smul.u32 %s32, %s299
          %s301 = sadd.s32 %s33, %s300
          %s302 = smul.u32 8, %s301
          %s304 = ssub.s32 512, 512
          %305 = vsyncadd %s294, %s304
          %s306 = smul.addr %s302, 64
          %s307 = scalar_lea.hbm %s0, %s306
          %s308 = sshll.u32 %s297, 4
          %s309 = int_to_ptr.vmem [resolvable:$true] %s308
          %314 = dma.hbm_to_vmem [thread:$0]  %s307, 512, %s309, %s294, 64, 64, 4
        $region20: #{tpu_custom_call.1} parent=15 // pred_fallthru
          _
        // Predicated region
        $region21: #{tpu_custom_call.1} parent=15 // pred_check
          %p315 = pneg %p99
        $region22: #{tpu_custom_call.1} parent=15 // pred_check_branch
          %317 = sbr.rel (%p315) target = $region24
        $region23: #{tpu_custom_call.1} parent=15 // pred_region
          %s318 = sand.u32 %s25, 1
          %s319 = scalar_lea.sflag [#allocation8], %s318
          %s320 = sand.u32 %s89, 1
          %s321 = smul.addr %s320, 32
          %s322 = scalar_lea.vmem [#allocation7], %s321
          %s323 = smul.u32 %s33, 2
          %s324 = ssub.s32 0, %s323
          %s325 = smul.u32 %s32, %s324
          %s326 = sadd.s32 %s33, %s325
          %s327 = smul.u32 8, %s326
          %s329 = ssub.s32 512, 512
          %330 = vsyncadd %s319, %s329
          %s331 = smul.addr %s327, 64
          %s332 = scalar_lea.hbm %s1, %s331
          %s333 = sshll.u32 %s322, 4
          %s334 = int_to_ptr.vmem [resolvable:$true] %s333
          %339 = dma.hbm_to_vmem [thread:$0]  %s332, 512, %s334, %s319, 64, 64, 4
        $region24: #{tpu_custom_call.1} parent=15 // pred_fallthru
          _
        // Predicated region
        $region25: #{tpu_custom_call.1} parent=15 // pred_check
          %p340 = pneg %p125
        $region26: #{tpu_custom_call.1} parent=15 // pred_check_branch
          %342 = sbr.rel (%p340) target = $region28
        $region27: #{tpu_custom_call.1} parent=15 // pred_region
          %s343 = sand.u32 %s25, 1
          %s344 = scalar_lea.sflag [#allocation8], %s343
          %s345 = sand.u32 %s115, 1
          %s346 = smul.addr %s345, 16
          %s347 = scalar_lea.vmem [#allocation9], %s346
          %s349 = ssub.s32 256, 256
          %350 = vsyncadd %s344, %s349
          %s351 = smul.addr %s32, 4
          %s352 = smul.addr %s351, 64
          %s353 = scalar_lea.hbm %s2, %s352
          %s354 = sshll.u32 %s347, 4
          %s355 = int_to_ptr.vmem [resolvable:$true] %s354
          %360 = dma.hbm_to_vmem [thread:$0]  %s353, 256, %s355, %s344, 64, 64, 4
        $region28: #{tpu_custom_call.1} parent=15 // pred_fallthru
          _
        // Predicated region
        $region29: #{tpu_custom_call.1} parent=15 // pred_check
          %p361 = pneg %p151
        $region30: #{tpu_custom_call.1} parent=15 // pred_check_branch
          %363 = sbr.rel (%p361) target = $region32
        $region31: #{tpu_custom_call.1} parent=15 // pred_region
          %s364 = sand.u32 %s25, 1
          %s365 = scalar_lea.sflag [#allocation11], %s364
          %s366 = sand.u32 %s141, 1
          %s367 = smul.addr %s366, 16
          %s368 = scalar_lea.vmem [#allocation10], %s367
          %s370 = ssub.s32 256, 256
          %371 = vsyncadd %s365, %s370
          %s372 = smul.addr %s32, 4
          %s373 = smul.addr %s372, 64
          %s374 = scalar_lea.hbm %s3, %s373
          %s375 = sshll.u32 %s368, 4
          %s376 = int_to_ptr.vmem [resolvable:$true] %s375
          %381 = dma.hbm_to_vmem [thread:$0]  %s374, 256, %s376, %s365, 64, 64, 4
        $region32: #{tpu_custom_call.1} parent=15 // pred_fallthru
          _
        // Predicated region
        $region33: #{tpu_custom_call.1} parent=15 // pred_check
          %p382 = pneg %p177
        $region34: #{tpu_custom_call.1} parent=15 // pred_check_branch
          %384 = sbr.rel (%p382) target = $region36
        $region35: #{tpu_custom_call.1} parent=15 // pred_region
          %p385 = scmp.lt.s32.totalorder %s32, 1
          %s386 = scalar_select %p385, %s32, 1
          %s387 = scalar_lea.vmem %s4, %s386
        $region36: #{tpu_custom_call.1} parent=15 // pred_fallthru
          _
        // Predicated region
        $region37: #{tpu_custom_call.1} parent=15 // pred_check
          %p388 = pneg %p203
        $region38: #{tpu_custom_call.1} parent=15 // pred_check_branch
          %390 = sbr.rel (%p388) target = $region40
        $region39: #{tpu_custom_call.1} parent=15 // pred_region
          %s391 = sand.u32 %s25, 1
          %s392 = scalar_lea.sflag [#allocation11], %s391
          %s393 = sand.u32 %s193, 1
          %s394 = smul.addr %s393, 8
          %s395 = scalar_lea.vmem [#allocation12], %s394
          %s397 = ssub.s32 128, 128
          %398 = vsyncadd %s392, %s397
          %s399 = smul.addr %s32, 2
          %s400 = smul.addr %s399, 64
          %s401 = scalar_lea.hbm %s5, %s400
          %s402 = sshll.u32 %s395, 4
          %s403 = int_to_ptr.vmem [resolvable:$true] %s402
          %408 = dma.hbm_to_vmem [thread:$0]  %s401, 128, %s403, %s392, 64, 64, 4
        $region40: #{tpu_custom_call.1} parent=15 // pred_fallthru
          _
        // Predicated region
        $region41: #{tpu_custom_call.1} parent=15 // pred_check
          %p409 = pneg %p229
        $region42: #{tpu_custom_call.1} parent=15 // pred_check_branch
          %411 = sbr.rel (%p409) target = $region44
        $region43: #{tpu_custom_call.1} parent=15 // pred_region
          %p412 = scmp.lt.s32.totalorder %s32, 1
          %s413 = scalar_select %p412, %s32, 1
          %s414 = scalar_lea.vmem %s6, %s413
        $region44: #{tpu_custom_call.1} parent=15 // pred_fallthru
          _
      $region16: #{tpu_custom_call.1} parent=5 // pred_fallthru
        _
      %p415 = scmp.le.s32.totalorder 1, %s25
      %p416 = scmp.lt.s32.totalorder %s25, 3
      %p417 = pnand %p415, %p416
      %p418 = pneg %p417
      // Predicated region
      $region45: #{tpu_custom_call.1} parent=5 // pred_check
        _
      $region46: #{tpu_custom_call.1} parent=5 // pred_check_branch
        %420 = sbr.rel (%p417) target = $region48
      $region47: #{tpu_custom_call.1} parent=5 // pred_region
        %s421 = ssub.s32 %s25, 1
        %s422 = sand.u32 %s58, 1
        %s423 = scalar_lea.sflag [#allocation5], %s422
        %s424 = sand.u32 %s58, 1
        %s425 = smul.addr %s424, 32
        %s426 = scalar_lea.vmem [#allocation4], %s425
        // Predicated region
        $region49: #{tpu_custom_call.1} parent=47 // pred_check
          %p427 = pneg %p71
        $region50: #{tpu_custom_call.1} parent=47 // pred_check_branch
          %429 = sbr.rel (%p427) target = $region52
        $region51: #{tpu_custom_call.1} parent=47 // pred_region
          %430 = dma.done %s423, 512
        $region52: #{tpu_custom_call.1} parent=47 // pred_fallthru
          _
        %s431 = sand.u32 %s30, 1
        %s432 = scalar_lea.sflag [#allocation8], %s431
        %s433 = sand.u32 %s92, 1
        %s434 = smul.addr %s433, 32
        %s435 = scalar_lea.vmem [#allocation7], %s434
        // Predicated region
        $region53: #{tpu_custom_call.1} parent=47 // pred_check
          %p436 = pneg %p105
        $region54: #{tpu_custom_call.1} parent=47 // pred_check_branch
          %438 = sbr.rel (%p436) target = $region56
        $region55: #{tpu_custom_call.1} parent=47 // pred_region
          %439 = dma.done %s432, 512
        $region56: #{tpu_custom_call.1} parent=47 // pred_fallthru
          _
        %s440 = sand.u32 %s30, 1
        %s441 = scalar_lea.sflag [#allocation8], %s440
        %s442 = sand.u32 %s118, 1
        %s443 = smul.addr %s442, 16
        %s444 = scalar_lea.vmem [#allocation9], %s443
        // Predicated region
        $region57: #{tpu_custom_call.1} parent=47 // pred_check
          %p445 = pneg %p131
        $region58: #{tpu_custom_call.1} parent=47 // pred_check_branch
          %447 = sbr.rel (%p445) target = $region60
        $region59: #{tpu_custom_call.1} parent=47 // pred_region
          %448 = dma.done %s441, 256
        $region60: #{tpu_custom_call.1} parent=47 // pred_fallthru
          _
        %s449 = sand.u32 %s30, 1
        %s450 = scalar_lea.sflag [#allocation11], %s449
        %s451 = sand.u32 %s144, 1
        %s452 = smul.addr %s451, 16
        %s453 = scalar_lea.vmem [#allocation10], %s452
        // Predicated region
        $region61: #{tpu_custom_call.1} parent=47 // pred_check
          %p454 = pneg %p157
        $region62: #{tpu_custom_call.1} parent=47 // pred_check_branch
          %456 = sbr.rel (%p454) target = $region64
        $region63: #{tpu_custom_call.1} parent=47 // pred_region
          %457 = dma.done %s450, 256
        $region64: #{tpu_custom_call.1} parent=47 // pred_fallthru
          _
        %s458 = sand.u32 %s30, 1
        %s459 = scalar_lea.sflag [#allocation11], %s458
        %s460 = sand.u32 %s196, 1
        %s461 = smul.addr %s460, 8
        %s462 = scalar_lea.vmem [#allocation12], %s461
        // Predicated region
        $region65: #{tpu_custom_call.1} parent=47 // pred_check
          %p463 = pneg %p209
        $region66: #{tpu_custom_call.1} parent=47 // pred_check_branch
          %465 = sbr.rel (%p463) target = $region68
        $region67: #{tpu_custom_call.1} parent=47 // pred_region
          %466 = dma.done %s459, 128
        $region68: #{tpu_custom_call.1} parent=47 // pred_fallthru
          _
        %s467 = sand.u32 %s58, 1
        %s468 = scalar_lea.sflag [#allocation5], %s467
        %s469 = sand.u32 %s58, 1
        %s470 = smul.addr %s469, 32
        %s471 = scalar_lea.vmem [#allocation4], %s470
        %p472 = pneg %p71
        %p473 = pneg %p68
        %s474 = sand.u32 %s30, 1
        %s475 = scalar_lea.sflag [#allocation8], %s474
        %s476 = sand.u32 %s92, 1
        %s477 = smul.addr %s476, 32
        %s478 = scalar_lea.vmem [#allocation7], %s477
        %p479 = pneg %p105
        %p480 = pneg %p102
        %s481 = sand.u32 %s30, 1
        %s482 = scalar_lea.sflag [#allocation8], %s481
        %s483 = sand.u32 %s118, 1
        %s484 = smul.addr %s483, 16
        %s485 = scalar_lea.vmem [#allocation9], %s484
        %p486 = pneg %p131
        %p487 = pneg %p128
        %s488 = sand.u32 %s30, 1
        %s489 = scalar_lea.sflag [#allocation11], %s488
        %s490 = sand.u32 %s144, 1
        %s491 = smul.addr %s490, 16
        %s492 = scalar_lea.vmem [#allocation10], %s491
        %p493 = pneg %p157
        %p494 = pneg %p154
        %p495 = scmp.lt.s32.totalorder %s34, 1
        %s496 = scalar_select %p495, %s34, 1
        %s497 = scalar_lea.vmem %s4, %s496
        %p498 = pneg %p183
        %p499 = pneg %p180
        %s500 = sand.u32 %s30, 1
        %s501 = scalar_lea.sflag [#allocation11], %s500
        %s502 = sand.u32 %s196, 1
        %s503 = smul.addr %s502, 8
        %s504 = scalar_lea.vmem [#allocation12], %s503
        %p505 = pneg %p209
        %p506 = pneg %p206
        %p507 = scmp.lt.s32.totalorder %s34, 1
        %s508 = scalar_select %p507, %s34, 1
        %s509 = scalar_lea.vmem %s6, %s508
        %p510 = pneg %p235
        %p511 = pneg %p232
        %p512 = pneg %p271
        %p513 = pneg %p268
        %s514 = sand.u32 %s258, 1
        %s515 = scalar_lea.sflag [#allocation6], %s514
        %s516 = sand.u32 %s258, 1
        %s517 = smul.addr %s516, 32
        %s518 = scalar_lea.vmem [#allocation13], %s517
        %s519 = smul.u32 %s35, 2
        %s520 = ssub.s32 0, %s519
        %s521 = smul.u32 %s34, %s520
        %s522 = sadd.s32 %s35, %s521
        %s523 = smul.u32 8, %s522
        %s524 = smul.u32 %s35, 2
        %s525 = ssub.s32 0, %s524
        %s526 = smul.u32 %s34, %s525
        %s527 = sadd.s32 %s35, %s526
        %s528 = smul.u32 8, %s527
        %p529 = scmp.lt.s32.totalorder %s34, 1
        %s530 = scalar_select %p529, %s34, 1
        %s531 = scalar_lea.vmem %s4, %s530
        %p532 = scmp.lt.s32.totalorder %s34, 1
        %s533 = scalar_select %p532, %s34, 1
        %s534 = scalar_lea.vmem %s6, %s533
        %s535 = smul.u32 %s35, 2
        %s536 = ssub.s32 0, %s535
        %s537 = smul.u32 %s34, %s536
        %s538 = sadd.s32 %s35, %s537
        %s539 = smul.u32 8, %s538
        %p541 = scmp.eq.s32.totalorder %s35, 0
        // Predicated region
        $region69: #{tpu_custom_call.1} parent=47 // pred_check
          %p542 = pneg %p541
        $region70: #{tpu_custom_call.1} parent=47 // pred_check_branch
          %544 = sbr.rel (%p542) target = $region72
        $region71: #{tpu_custom_call.1} parent=47 // pred_region
          %vm545 = vcmask 130048
          %546 = vst.msk [vmem:[#allocation3] sm:$0xff] %vm545, 0.0
        $region72: #{tpu_custom_call.1} parent=47 // pred_fallthru
          _
        %v547 = vld [vmem:[%s426] sm:$0xf]
        %v548 = vld [vmem:[%s426 + $0x4] sm:$0xf]
        %v549 = vld [vmem:[%s426 + $0x8] sm:$0xf]
        %v550 = vld [vmem:[%s426 + $0xc] sm:$0xf]
        %v551 = vld [vmem:[%s426 + $0x10] sm:$0xf]
        %v552 = vld [vmem:[%s426 + $0x14] sm:$0xf]
        %v553 = vld [vmem:[%s426 + $0x18] sm:$0xf]
        %v554 = vld [vmem:[%s426 + $0x1c] sm:$0xf]
        %v555 = vld [vmem:[%s435] sm:$0xf]
        %v556 = vld [vmem:[%s435 + $0x4] sm:$0xf]
        %v557 = vld [vmem:[%s435 + $0x8] sm:$0xf]
        %v558 = vld [vmem:[%s435 + $0xc] sm:$0xf]
        %v559 = vld [vmem:[%s435 + $0x10] sm:$0xf]
        %v560 = vld [vmem:[%s435 + $0x14] sm:$0xf]
        %v561 = vld [vmem:[%s435 + $0x18] sm:$0xf]
        %v562 = vld [vmem:[%s435 + $0x1c] sm:$0xf]
        %v563 = vld [vmem:[%s444] sm:$0xf]
        %v564 = vld [vmem:[%s444 + $0x4] sm:$0xf]
        %v565 = vld [vmem:[%s444 + $0x8] sm:$0xf]
        %v566 = vld [vmem:[%s444 + $0xc] sm:$0xf]
        %v567 = vld [vmem:[%s453] sm:$0xf]
        %v568 = vld [vmem:[%s453 + $0x4] sm:$0xf]
        %v569 = vld [vmem:[%s453 + $0x8] sm:$0xf]
        %v570 = vld [vmem:[%s453 + $0xc] sm:$0xf]
        %v579 = vunpack.c.l.b16 %v555
        %v580 = vunpack.c.l.b16 %v556
        %v581 = vunpack.c.l.b16 %v557
        %v582 = vunpack.c.l.b16 %v558
        %v583 = vunpack.c.l.b16 %v559
        %v584 = vunpack.c.l.b16 %v560
        %v585 = vunpack.c.l.b16 %v561
        %v586 = vunpack.c.l.b16 %v562
        %v587 = vpack.c.b16 %v580, %v579
        %v588 = vpack.c.b16 %v582, %v581
        %v589 = vpack.c.b16 %v584, %v583
        %v590 = vpack.c.b16 %v586, %v585
        %v595 = vunpack.c.l.b16 %v567
        %v596 = vunpack.c.l.b16 %v568
        %v597 = vunpack.c.l.b16 %v569
        %v598 = vunpack.c.l.b16 %v570
        %v599 = vpack.c.b16 %v596, %v595
        %v600 = vpack.c.b16 %v598, %v597
        %vm603 = vcmask 261120
        %v605 = vsel %vm603, %v587, 0
        %v608 = vsel %vm603, %v588, 0
        %v611 = vsel %vm603, %v589, 0
        %v614 = vsel %vm603, %v590, 0
        %616 = vmatprep.subr.bf16.mxu0 0
        %617 = vmatpush1.bf16.msra.mxu0 0
        %618 = vmatprep.subr.bf16.mxu0 0
        %619 = vmatpush1.bf16.msra.mxu0 0
        %620 = vmatprep.subr.bf16.mxu0 0
        %621 = vmatpush1.bf16.msra.mxu0 0
        %622 = vmatprep.subr.bf16.mxu0 0
        %623 = vmatpush1.bf16.msra.mxu0 0
        %624 = vmatprep.subr.bf16.mxu0 0
        %625 = vmatpush1.bf16.msra.mxu0 0
        %626 = vmatprep.subr.bf16.mxu0 0
        %627 = vmatpush1.bf16.msra.mxu0 0
        %628 = vmatprep.subr.bf16.mxu0 0
        %629 = vmatpush1.bf16.msra.mxu0 %v600
        %630 = vmatprep.subr.bf16.mxu0 0
        %631 = vmatpush1.bf16.msra.mxu0 %v599
        %632 = vmatprep.subr.bf16.mxu0 0
        %633 = vmatpush2.bf16.msra.mxu0 0
        %634 = vmatprep.subr.bf16.mxu0 0
        %635 = vmatpush2.bf16.msra.mxu0 0
        %636 = vmatprep.subr.bf16.mxu0 0
        %637 = vmatpush2.bf16.msra.mxu0 0
        %638 = vmatprep.subr.bf16.mxu0 0
        %639 = vmatpush2.bf16.msra.mxu0 0
        %640 = vmatprep.subr.bf16.mxu0 0
        %641 = vmatpush2.bf16.msra.mxu0 0
        %642 = vmatprep.subr.bf16.mxu0 0
        %643 = vmatpush2.bf16.msra.mxu0 0
        %644 = vmatprep.subr.bf16.mxu0 0
        %645 = vmatpush2.bf16.msra.mxu0 0
        %646 = vmatprep.subr.bf16.mxu0 0
        %647 = vmatpush2.bf16.msra.mxu0 0
        %648 = vmatprep.mubr.bf16.mxu0 0
        %649 = vmatmul.mubr.bf16.gmra.mxu0 %v605
        %v650 = vpop.f32.mrf.mxu0
        %v651 = vadd.f32 0.0, %v650
        %v652 = vpop.f32.mrf.mxu0
        %v653 = vpop.f32.mrf.mxu0
        %v654 = vadd.f32 0.0, %v653
        %v655 = vpop.f32.mrf.mxu0
        %656 = vmatprep.mubr.bf16.mxu0 0
        %657 = vmatmul.mubr.bf16.gmra.mxu0 %v608
        %v658 = vpop.f32.mrf.mxu0
        %v659 = vadd.f32 0.0, %v658
        %v660 = vpop.f32.mrf.mxu0
        %v661 = vpop.f32.mrf.mxu0
        %v662 = vadd.f32 0.0, %v661
        %v663 = vpop.f32.mrf.mxu0
        %664 = vmatprep.mubr.bf16.mxu0 0
        %665 = vmatmul.mubr.bf16.gmra.mxu0 %v611
        %v666 = vpop.f32.mrf.mxu0
        %v667 = vadd.f32 0.0, %v666
        %v668 = vpop.f32.mrf.mxu0
        %v669 = vpop.f32.mrf.mxu0
        %v670 = vadd.f32 0.0, %v669
        %v671 = vpop.f32.mrf.mxu0
        %672 = vmatprep.mubr.bf16.mxu0 0
        %673 = vmatmul.mubr.bf16.gmra.mxu0 %v614
        %v674 = vpop.f32.mrf.mxu0
        %v675 = vadd.f32 0.0, %v674
        %v676 = vpop.f32.mrf.mxu0
        %v677 = vpop.f32.mrf.mxu0
        %v678 = vadd.f32 0.0, %v677
        %v679 = vpop.f32.mrf.mxu0
        %680 = vdwg.mxu0
        %v689 = vunpack.c.l.b16 %v547
        %v690 = vunpack.c.l.b16 %v548
        %v691 = vunpack.c.l.b16 %v549
        %v692 = vunpack.c.l.b16 %v550
        %v693 = vunpack.c.l.b16 %v551
        %v694 = vunpack.c.l.b16 %v552
        %v695 = vunpack.c.l.b16 %v553
        %v696 = vunpack.c.l.b16 %v554
        %v697 = vpack.c.b16 %v690, %v689
        %v698 = vpack.c.b16 %v692, %v691
        %v699 = vpack.c.b16 %v694, %v693
        %v700 = vpack.c.b16 %v696, %v695
        %v705 = vunpack.c.l.b16 %v563
        %v706 = vunpack.c.l.b16 %v564
        %v707 = vunpack.c.l.b16 %v565
        %v708 = vunpack.c.l.b16 %v566
        %v709 = vpack.c.b16 %v706, %v705
        %v710 = vpack.c.b16 %v708, %v707
        %v714 = vsel %vm603, %v697, 0
        %v717 = vsel %vm603, %v698, 0
        %v720 = vsel %vm603, %v699, 0
        %v723 = vsel %vm603, %v700, 0
        %725 = vmatprep.subr.bf16.mxu0 0
        %726 = vmatpush1.bf16.msra.mxu0 0
        %727 = vmatprep.subr.bf16.mxu0 0
        %728 = vmatpush1.bf16.msra.mxu0 0
        %729 = vmatprep.subr.bf16.mxu0 0
        %730 = vmatpush1.bf16.msra.mxu0 0
        %731 = vmatprep.subr.bf16.mxu0 0
        %732 = vmatpush1.bf16.msra.mxu0 0
        %733 = vmatprep.subr.bf16.mxu0 0
        %734 = vmatpush1.bf16.msra.mxu0 0
        %735 = vmatprep.subr.bf16.mxu0 0
        %736 = vmatpush1.bf16.msra.mxu0 0
        %737 = vmatprep.subr.bf16.mxu0 0
        %738 = vmatpush1.bf16.msra.mxu0 %v710
        %739 = vmatprep.subr.bf16.mxu0 0
        %740 = vmatpush1.bf16.msra.mxu0 %v709
        %741 = vmatprep.subr.bf16.mxu0 0
        %742 = vmatpush2.bf16.msra.mxu0 0
        %743 = vmatprep.subr.bf16.mxu0 0
        %744 = vmatpush2.bf16.msra.mxu0 0
        %745 = vmatprep.subr.bf16.mxu0 0
        %746 = vmatpush2.bf16.msra.mxu0 0
        %747 = vmatprep.subr.bf16.mxu0 0
        %748 = vmatpush2.bf16.msra.mxu0 0
        %749 = vmatprep.subr.bf16.mxu0 0
        %750 = vmatpush2.bf16.msra.mxu0 0
        %751 = vmatprep.subr.bf16.mxu0 0
        %752 = vmatpush2.bf16.msra.mxu0 0
        %753 = vmatprep.subr.bf16.mxu0 0
        %754 = vmatpush2.bf16.msra.mxu0 0
        %755 = vmatprep.subr.bf16.mxu0 0
        %756 = vmatpush2.bf16.msra.mxu0 0
        %757 = vmatprep.mubr.bf16.mxu0 0
        %758 = vmatmul.mubr.bf16.gmra.mxu0 %v714
        %v759 = vpop.f32.mrf.mxu0
        %v760 = vadd.f32 %v651, %v759
        %v761 = vpop.f32.mrf.mxu0
        %v762 = vpop.f32.mrf.mxu0
        %v763 = vadd.f32 %v654, %v762
        %v764 = vpop.f32.mrf.mxu0
        %765 = vmatprep.mubr.bf16.mxu0 0
        %766 = vmatmul.mubr.bf16.gmra.mxu0 %v717
        %v767 = vpop.f32.mrf.mxu0
        %v768 = vadd.f32 %v659, %v767
        %v769 = vpop.f32.mrf.mxu0
        %v770 = vpop.f32.mrf.mxu0
        %v771 = vadd.f32 %v662, %v770
        %v772 = vpop.f32.mrf.mxu0
        %773 = vmatprep.mubr.bf16.mxu0 0
        %774 = vmatmul.mubr.bf16.gmra.mxu0 %v720
        %v775 = vpop.f32.mrf.mxu0
        %v776 = vadd.f32 %v667, %v775
        %v777 = vpop.f32.mrf.mxu0
        %v778 = vpop.f32.mrf.mxu0
        %v779 = vadd.f32 %v670, %v778
        %v780 = vpop.f32.mrf.mxu0
        %781 = vmatprep.mubr.bf16.mxu0 0
        %782 = vmatmul.mubr.bf16.gmra.mxu0 %v723
        %v783 = vpop.f32.mrf.mxu0
        %v784 = vadd.f32 %v675, %v783
        %v785 = vpop.f32.mrf.mxu0
        %v786 = vpop.f32.mrf.mxu0
        %v787 = vadd.f32 %v678, %v786
        %v788 = vpop.f32.mrf.mxu0
        %789 = vdwg.mxu0
        %v790 = vld [vmem:[%s531] sm:$0x1]
        %v792 = vlaneseq
        %v793 = vshrl.u32 %v792, 7
        %v794 = vsub.s32 0, %v793
        %v795 = vrot.slane %v790, %v794
        %v797 = vadd.f32 %v760, %v795
        %v798 = vadd.f32 %v763, %v795
        %v799 = vadd.f32 %v768, %v795
        %v800 = vadd.f32 %v771, %v795
        %v801 = vadd.f32 %v776, %v795
        %v802 = vadd.f32 %v779, %v795
        %v803 = vadd.f32 %v784, %v795
        %v804 = vadd.f32 %v787, %v795
        %vm805 = vcmask 392192
        %806 = vst.msk [vmem:[#allocation2] sm:$0xff] %vm805, %v797
        %807 = vst.msk [vmem:[#allocation2 + $0x8] sm:$0xff] %vm805, %v798
        %808 = vst.msk [vmem:[#allocation2 + $0x10] sm:$0xff] %vm805, %v799
        %809 = vst.msk [vmem:[#allocation2 + $0x18] sm:$0xff] %vm805, %v800
        %810 = vst.msk [vmem:[#allocation2 + $0x20] sm:$0xff] %vm805, %v801
        %811 = vst.msk [vmem:[#allocation2 + $0x28] sm:$0xff] %vm805, %v802
        %812 = vst.msk [vmem:[#allocation2 + $0x30] sm:$0xff] %vm805, %v803
        %813 = vst.msk [vmem:[#allocation2 + $0x38] sm:$0xff] %vm805, %v804
        %v814 = vld [vmem:[#allocation3] sm:$0xff]
        %s815 = smul.u32 %s34, 7
        %s816 = smul.u32 %s815, 8
        %s817 = scalar_lea.vmem [#allocation2], %s816
        %v818 = vld [vmem:[%s817] sm:$0xff]
        %v819 = vpack.c.bf16 %v814, %v814
        %v820 = vld [vmem:[%s462] sm:$0xf]
        %v821 = vld [vmem:[%s462 + $0x4] sm:$0xf]
        %v822 = vld [vmem:[%s534] sm:$0x1]
        %v824 = vlaneseq
        %v825 = vshrl.u32 %v824, 7
        %v826 = vsub.s32 0, %v825
        %v827 = vrot.slane %v822, %v826
        %v831 = vunpack.c.l.b16 %v820
        %v832 = vunpack.c.l.b16 %v821
        %v833 = vpack.c.b16 %v832, %v831
        %vm835 = vcmask 130048
        %v837 = vsel %vm835, %v819, 0
        %839 = vmatprep.subr.bf16.mxu0 0
        %840 = vmatpush1.bf16.msra.mxu0 0
        %841 = vmatprep.subr.bf16.mxu0 0
        %842 = vmatpush1.bf16.msra.mxu0 0
        %843 = vmatprep.subr.bf16.mxu0 0
        %844 = vmatpush1.bf16.msra.mxu0 0
        %845 = vmatprep.subr.bf16.mxu0 0
        %846 = vmatpush1.bf16.msra.mxu0 0
        %847 = vmatprep.subr.bf16.mxu0 0
        %848 = vmatpush1.bf16.msra.mxu0 0
        %849 = vmatprep.subr.bf16.mxu0 0
        %850 = vmatpush1.bf16.msra.mxu0 0
        %851 = vmatprep.subr.bf16.mxu0 0
        %852 = vmatpush1.bf16.msra.mxu0 0
        %853 = vmatprep.subr.bf16.mxu0 0
        %854 = vmatpush1.bf16.msra.mxu0 %v833
        %855 = vmatprep.subr.bf16.mxu0 0
        %856 = vmatpush2.bf16.msra.mxu0 0
        %857 = vmatprep.subr.bf16.mxu0 0
        %858 = vmatpush2.bf16.msra.mxu0 0
        %859 = vmatprep.subr.bf16.mxu0 0
        %860 = vmatpush2.bf16.msra.mxu0 0
        %861 = vmatprep.subr.bf16.mxu0 0
        %862 = vmatpush2.bf16.msra.mxu0 0
        %863 = vmatprep.subr.bf16.mxu0 0
        %864 = vmatpush2.bf16.msra.mxu0 0
        %865 = vmatprep.subr.bf16.mxu0 0
        %866 = vmatpush2.bf16.msra.mxu0 0
        %867 = vmatprep.subr.bf16.mxu0 0
        %868 = vmatpush2.bf16.msra.mxu0 0
        %869 = vmatprep.subr.bf16.mxu0 0
        %870 = vmatpush2.bf16.msra.mxu0 0
        %871 = vmatprep.mubr.bf16.mxu0 0
        %872 = vmatmul.mubr.bf16.gmra.mxu0 %v837
        %v873 = vpop.f32.mrf.mxu0
        %v874 = vadd.f32 %v827, %v873
        %v875 = vpop.f32.mrf.mxu0
        %v876 = vpop.f32.mrf.mxu0
        %v877 = vpop.f32.mrf.mxu0
        %878 = vdwg.mxu0
        %v879 = vadd.f32 %v818, %v874
        %v880 = vxor.u32 %v879, 2147483648
        %v881 = vmul.f32 %v880, 1.442695
        %v882 = vpow.pop %v881
        %v883 = vadd.f32 %v882, 1.0
        %v884 = vrcp.pop %v883
        %v885 = vmul.f32 1.0, %v884
        %887 = vrot.lane.b32.xlu0 %v874, 96
        %v888 = vpop.permute.xlu0 %887
        %v890 = vmul.f32 %v885, %v888
        %892 = vrot.lane.b32.xlu0 %v890, 32
        %v893 = vpop.permute.xlu0 %892
        %v895 = vadd.f32 %v818, %v893
        %v896 = vtanh.pop %v895
        %v897 = vsub.f32 1.0, %v885
        %899 = vrot.lane.b32.xlu0 %v896, 112
        %v900 = vpop.permute.xlu0 %899
        %v902 = vmul.f32 %v897, %v900
        %904 = vrot.lane.b32.xlu0 %v814, 16
        %v905 = vpop.permute.xlu0 %904
        %v907 = vmul.f32 %v885, %v905
        %v908 = vadd.f32 %v902, %v907
        %v909 = vpack.c.bf16 %v908, %v908
        %v911 = vunpack.c.l.b16 %v909
        %v912 = vpack.c.b16 %v911, %v911
        %913 = vrot.lane.b32.xlu0 %v912, 112
        %v914 = vpop.permute.xlu0 %913
        %s916 = smul.addr %s815, 4
        %s917 = scalar_lea.vmem %s518, %s916 [#allocation13]
        %vm918 = vcmask 125952
        %919 = vst.msk [vmem:[%s917] sm:$0xf] %vm918, %v914
        %s920 = smul.u32 %s34, 5
        %s921 = sadd.s32 %s920, 1
        %s922 = smul.u32 %s921, 8
        %s923 = scalar_lea.vmem [#allocation2], %s922
        %v924 = vld [vmem:[%s923] sm:$0xff]
        %v925 = vld [vmem:[%s462] sm:$0xf]
        %v926 = vld [vmem:[%s462 + $0x4] sm:$0xf]
        %v927 = vld [vmem:[%s534] sm:$0x1]
        %v929 = vlaneseq
        %v930 = vshrl.u32 %v929, 7
        %v931 = vsub.s32 0, %v930
        %v932 = vrot.slane %v927, %v931
        %934 = vrot.lane.b32.xlu0 %v909, 112
        %v935 = vpop.permute.xlu0 %934
        %v938 = vunpack.c.l.b16 %v925
        %v939 = vunpack.c.l.b16 %v926
        %v940 = vpack.c.b16 %v939, %v938
        %v943 = vsel %vm835, %v935, 0
        %945 = vmatprep.subr.bf16.mxu0 0
        %946 = vmatpush1.bf16.msra.mxu0 0
        %947 = vmatprep.subr.bf16.mxu0 0
        %948 = vmatpush1.bf16.msra.mxu0 0
        %949 = vmatprep.subr.bf16.mxu0 0
        %950 = vmatpush1.bf16.msra.mxu0 0
        %951 = vmatprep.subr.bf16.mxu0 0
        %952 = vmatpush1.bf16.msra.mxu0 0
        %953 = vmatprep.subr.bf16.mxu0 0
        %954 = vmatpush1.bf16.msra.mxu0 0
        %955 = vmatprep.subr.bf16.mxu0 0
        %956 = vmatpush1.bf16.msra.mxu0 0
        %957 = vmatprep.subr.bf16.mxu0 0
        %958 = vmatpush1.bf16.msra.mxu0 0
        %959 = vmatprep.subr.bf16.mxu0 0
        %960 = vmatpush1.bf16.msra.mxu0 %v940
        %961 = vmatprep.subr.bf16.mxu0 0
        %962 = vmatpush2.bf16.msra.mxu0 0
        %963 = vmatprep.subr.bf16.mxu0 0
        %964 = vmatpush2.bf16.msra.mxu0 0
        %965 = vmatprep.subr.bf16.mxu0 0
        %966 = vmatpush2.bf16.msra.mxu0 0
        %967 = vmatprep.subr.bf16.mxu0 0
        %968 = vmatpush2.bf16.msra.mxu0 0
        %969 = vmatprep.subr.bf16.mxu0 0
        %970 = vmatpush2.bf16.msra.mxu0 0
        %971 = vmatprep.subr.bf16.mxu0 0
        %972 = vmatpush2.bf16.msra.mxu0 0
        %973 = vmatprep.subr.bf16.mxu0 0
        %974 = vmatpush2.bf16.msra.mxu0 0
        %975 = vmatprep.subr.bf16.mxu0 0
        %976 = vmatpush2.bf16.msra.mxu0 0
        %977 = vmatprep.mubr.bf16.mxu0 0
        %978 = vmatmul.mubr.bf16.gmra.mxu0 %v943
        %v979 = vpop.f32.mrf.mxu0
        %v980 = vadd.f32 %v932, %v979
        %v981 = vpop.f32.mrf.mxu0
        %v982 = vpop.f32.mrf.mxu0
        %v983 = vpop.f32.mrf.mxu0
        %984 = vdwg.mxu0
        %v985 = vadd.f32 %v924, %v980
        %v986 = vxor.u32 %v985, 2147483648
        %v987 = vmul.f32 %v986, 1.442695
        %v988 = vpow.pop %v987
        %v989 = vadd.f32 %v988, 1.0
        %v990 = vrcp.pop %v989
        %v991 = vmul.f32 1.0, %v990
        %993 = vrot.lane.b32.xlu0 %v980, 96
        %v994 = vpop.permute.xlu0 %993
        %v996 = vmul.f32 %v991, %v994
        %998 = vrot.lane.b32.xlu0 %v996, 32
        %v999 = vpop.permute.xlu0 %998
        %v1001 = vadd.f32 %v924, %v999
        %v1002 = vtanh.pop %v1001
        %v1003 = vsub.f32 1.0, %v991
        %1005 = vrot.lane.b32.xlu0 %v1002, 112
        %v1006 = vpop.permute.xlu0 %1005
        %v1008 = vmul.f32 %v1003, %v1006
        %v1009 = vmul.f32 %v991, %v908
        %v1010 = vadd.f32 %v1008, %v1009
        %v1011 = vpack.c.bf16 %v1010, %v1010
        %v1013 = vunpack.c.l.b16 %v1011
        %v1014 = vpack.c.b16 %v1013, %v1013
        %1015 = vrot.lane.b32.xlu0 %v1014, 112
        %v1016 = vpop.permute.xlu0 %1015
        %s1018 = smul.addr %s921, 4
        %s1019 = scalar_lea.vmem %s518, %s1018 [#allocation13]
        %1020 = vst.msk [vmem:[%s1019] sm:$0xf] %vm918, %v1016
        %s1021 = smul.u32 %s34, 3
        %s1022 = sadd.s32 %s1021, 2
        %s1023 = smul.u32 %s1022, 8
        %s1024 = scalar_lea.vmem [#allocation2], %s1023
        %v1025 = vld [vmem:[%s1024] sm:$0xff]
        %v1026 = vld [vmem:[%s462] sm:$0xf]
        %v1027 = vld [vmem:[%s462 + $0x4] sm:$0xf]
        %v1028 = vld [vmem:[%s534] sm:$0x1]
        %v1030 = vlaneseq
        %v1031 = vshrl.u32 %v1030, 7
        %v1032 = vsub.s32 0, %v1031
        %v1033 = vrot.slane %v1028, %v1032
        %1035 = vrot.lane.b32.xlu0 %v1011, 112
        %v1036 = vpop.permute.xlu0 %1035
        %v1039 = vunpack.c.l.b16 %v1026
        %v1040 = vunpack.c.l.b16 %v1027
        %v1041 = vpack.c.b16 %v1040, %v1039
        %v1044 = vsel %vm835, %v1036, 0
        %1046 = vmatprep.subr.bf16.mxu0 0
        %1047 = vmatpush1.bf16.msra.mxu0 0
        %1048 = vmatprep.subr.bf16.mxu0 0
        %1049 = vmatpush1.bf16.msra.mxu0 0
        %1050 = vmatprep.subr.bf16.mxu0 0
        %1051 = vmatpush1.bf16.msra.mxu0 0
        %1052 = vmatprep.subr.bf16.mxu0 0
        %1053 = vmatpush1.bf16.msra.mxu0 0
        %1054 = vmatprep.subr.bf16.mxu0 0
        %1055 = vmatpush1.bf16.msra.mxu0 0
        %1056 = vmatprep.subr.bf16.mxu0 0
        %1057 = vmatpush1.bf16.msra.mxu0 0
        %1058 = vmatprep.subr.bf16.mxu0 0
        %1059 = vmatpush1.bf16.msra.mxu0 0
        %1060 = vmatprep.subr.bf16.mxu0 0
        %1061 = vmatpush1.bf16.msra.mxu0 %v1041
        %1062 = vmatprep.subr.bf16.mxu0 0
        %1063 = vmatpush2.bf16.msra.mxu0 0
        %1064 = vmatprep.subr.bf16.mxu0 0
        %1065 = vmatpush2.bf16.msra.mxu0 0
        %1066 = vmatprep.subr.bf16.mxu0 0
        %1067 = vmatpush2.bf16.msra.mxu0 0
        %1068 = vmatprep.subr.bf16.mxu0 0
        %1069 = vmatpush2.bf16.msra.mxu0 0
        %1070 = vmatprep.subr.bf16.mxu0 0
        %1071 = vmatpush2.bf16.msra.mxu0 0
        %1072 = vmatprep.subr.bf16.mxu0 0
        %1073 = vmatpush2.bf16.msra.mxu0 0
        %1074 = vmatprep.subr.bf16.mxu0 0
        %1075 = vmatpush2.bf16.msra.mxu0 0
        %1076 = vmatprep.subr.bf16.mxu0 0
        %1077 = vmatpush2.bf16.msra.mxu0 0
        %1078 = vmatprep.mubr.bf16.mxu0 0
        %1079 = vmatmul.mubr.bf16.gmra.mxu0 %v1044
        %v1080 = vpop.f32.mrf.mxu0
        %v1081 = vadd.f32 %v1033, %v1080
        %v1082 = vpop.f32.mrf.mxu0
        %v1083 = vpop.f32.mrf.mxu0
        %v1084 = vpop.f32.mrf.mxu0
        %1085 = vdwg.mxu0
        %v1086 = vadd.f32 %v1025, %v1081
        %v1087 = vxor.u32 %v1086, 2147483648
        %v1088 = vmul.f32 %v1087, 1.442695
        %v1089 = vpow.pop %v1088
        %v1090 = vadd.f32 %v1089, 1.0
        %v1091 = vrcp.pop %v1090
        %v1092 = vmul.f32 1.0, %v1091
        %1094 = vrot.lane.b32.xlu0 %v1081, 96
        %v1095 = vpop.permute.xlu0 %1094
        %v1097 = vmul.f32 %v1092, %v1095
        %1099 = vrot.lane.b32.xlu0 %v1097, 32
        %v1100 = vpop.permute.xlu0 %1099
        %v1102 = vadd.f32 %v1025, %v1100
        %v1103 = vtanh.pop %v1102
        %v1104 = vsub.f32 1.0, %v1092
        %1106 = vrot.lane.b32.xlu0 %v1103, 112
        %v1107 = vpop.permute.xlu0 %1106
        %v1109 = vmul.f32 %v1104, %v1107
        %v1110 = vmul.f32 %v1092, %v1010
        %v1111 = vadd.f32 %v1109, %v1110
        %v1112 = vpack.c.bf16 %v1111, %v1111
        %v1114 = vunpack.c.l.b16 %v1112
        %v1115 = vpack.c.b16 %v1114, %v1114
        %1116 = vrot.lane.b32.xlu0 %v1115, 112
        %v1117 = vpop.permute.xlu0 %1116
        %s1119 = smul.addr %s1022, 4
        %s1120 = scalar_lea.vmem %s518, %s1119 [#allocation13]
        %1121 = vst.msk [vmem:[%s1120] sm:$0xf] %vm918, %v1117
        %s1122 = sadd.s32 %s34, 3
        %s1123 = smul.u32 %s1122, 8
        %s1124 = scalar_lea.vmem [#allocation2], %s1123
        %v1125 = vld [vmem:[%s1124] sm:$0xff]
        %v1126 = vld [vmem:[%s462] sm:$0xf]
        %v1127 = vld [vmem:[%s462 + $0x4] sm:$0xf]
        %v1128 = vld [vmem:[%s534] sm:$0x1]
        %v1130 = vlaneseq
        %v1131 = vshrl.u32 %v1130, 7
        %v1132 = vsub.s32 0, %v1131
        %v1133 = vrot.slane %v1128, %v1132
        %1135 = vrot.lane.b32.xlu0 %v1112, 112
        %v1136 = vpop.permute.xlu0 %1135
        %v1139 = vunpack.c.l.b16 %v1126
        %v1140 = vunpack.c.l.b16 %v1127
        %v1141 = vpack.c.b16 %v1140, %v1139
        %v1144 = vsel %vm835, %v1136, 0
        %1146 = vmatprep.subr.bf16.mxu0 0
        %1147 = vmatpush1.bf16.msra.mxu0 0
        %1148 = vmatprep.subr.bf16.mxu0 0
        %1149 = vmatpush1.bf16.msra.mxu0 0
        %1150 = vmatprep.subr.bf16.mxu0 0
        %1151 = vmatpush1.bf16.msra.mxu0 0
        %1152 = vmatprep.subr.bf16.mxu0 0
        %1153 = vmatpush1.bf16.msra.mxu0 0
        %1154 = vmatprep.subr.bf16.mxu0 0
        %1155 = vmatpush1.bf16.msra.mxu0 0
        %1156 = vmatprep.subr.bf16.mxu0 0
        %1157 = vmatpush1.bf16.msra.mxu0 0
        %1158 = vmatprep.subr.bf16.mxu0 0
        %1159 = vmatpush1.bf16.msra.mxu0 0
        %1160 = vmatprep.subr.bf16.mxu0 0
        %1161 = vmatpush1.bf16.msra.mxu0 %v1141
        %1162 = vmatprep.subr.bf16.mxu0 0
        %1163 = vmatpush2.bf16.msra.mxu0 0
        %1164 = vmatprep.subr.bf16.mxu0 0
        %1165 = vmatpush2.bf16.msra.mxu0 0
        %1166 = vmatprep.subr.bf16.mxu0 0
        %1167 = vmatpush2.bf16.msra.mxu0 0
        %1168 = vmatprep.subr.bf16.mxu0 0
        %1169 = vmatpush2.bf16.msra.mxu0 0
        %1170 = vmatprep.subr.bf16.mxu0 0
        %1171 = vmatpush2.bf16.msra.mxu0 0
        %1172 = vmatprep.subr.bf16.mxu0 0
        %1173 = vmatpush2.bf16.msra.mxu0 0
        %1174 = vmatprep.subr.bf16.mxu0 0
        %1175 = vmatpush2.bf16.msra.mxu0 0
        %1176 = vmatprep.subr.bf16.mxu0 0
        %1177 = vmatpush2.bf16.msra.mxu0 0
        %1178 = vmatprep.mubr.bf16.mxu0 0
        %1179 = vmatmul.mubr.bf16.gmra.mxu0 %v1144
        %v1180 = vpop.f32.mrf.mxu0
        %v1181 = vadd.f32 %v1133, %v1180
        %v1182 = vpop.f32.mrf.mxu0
        %v1183 = vpop.f32.mrf.mxu0
        %v1184 = vpop.f32.mrf.mxu0
        %1185 = vdwg.mxu0
        %v1186 = vadd.f32 %v1125, %v1181
        %v1187 = vxor.u32 %v1186, 2147483648
        %v1188 = vmul.f32 %v1187, 1.442695
        %v1189 = vpow.pop %v1188
        %v1190 = vadd.f32 %v1189, 1.0
        %v1191 = vrcp.pop %v1190
        %v1192 = vmul.f32 1.0, %v1191
        %1194 = vrot.lane.b32.xlu0 %v1181, 96
        %v1195 = vpop.permute.xlu0 %1194
        %v1197 = vmul.f32 %v1192, %v1195
        %1199 = vrot.lane.b32.xlu0 %v1197, 32
        %v1200 = vpop.permute.xlu0 %1199
        %v1202 = vadd.f32 %v1125, %v1200
        %v1203 = vtanh.pop %v1202
        %v1204 = vsub.f32 1.0, %v1192
        %1206 = vrot.lane.b32.xlu0 %v1203, 112
        %v1207 = vpop.permute.xlu0 %1206
        %v1209 = vmul.f32 %v1204, %v1207
        %v1210 = vmul.f32 %v1192, %v1111
        %v1211 = vadd.f32 %v1209, %v1210
        %v1212 = vpack.c.bf16 %v1211, %v1211
        %v1214 = vunpack.c.l.b16 %v1212
        %v1215 = vpack.c.b16 %v1214, %v1214
        %1216 = vrot.lane.b32.xlu0 %v1215, 112
        %v1217 = vpop.permute.xlu0 %1216
        %s1219 = smul.addr %s1122, 4
        %s1220 = scalar_lea.vmem %s518, %s1219 [#allocation13]
        %1221 = vst.msk [vmem:[%s1220] sm:$0xf] %vm918, %v1217
        %s1222 = ssub.s32 4, %s34
        %s1223 = smul.u32 %s1222, 8
        %s1224 = scalar_lea.vmem [#allocation2], %s1223
        %v1225 = vld [vmem:[%s1224] sm:$0xff]
        %v1226 = vld [vmem:[%s462] sm:$0xf]
        %v1227 = vld [vmem:[%s462 + $0x4] sm:$0xf]
        %v1228 = vld [vmem:[%s534] sm:$0x1]
        %v1230 = vlaneseq
        %v1231 = vshrl.u32 %v1230, 7
        %v1232 = vsub.s32 0, %v1231
        %v1233 = vrot.slane %v1228, %v1232
        %1235 = vrot.lane.b32.xlu0 %v1212, 112
        %v1236 = vpop.permute.xlu0 %1235
        %v1239 = vunpack.c.l.b16 %v1226
        %v1240 = vunpack.c.l.b16 %v1227
        %v1241 = vpack.c.b16 %v1240, %v1239
        %v1244 = vsel %vm835, %v1236, 0
        %1246 = vmatprep.subr.bf16.mxu0 0
        %1247 = vmatpush1.bf16.msra.mxu0 0
        %1248 = vmatprep.subr.bf16.mxu0 0
        %1249 = vmatpush1.bf16.msra.mxu0 0
        %1250 = vmatprep.subr.bf16.mxu0 0
        %1251 = vmatpush1.bf16.msra.mxu0 0
        %1252 = vmatprep.subr.bf16.mxu0 0
        %1253 = vmatpush1.bf16.msra.mxu0 0
        %1254 = vmatprep.subr.bf16.mxu0 0
        %1255 = vmatpush1.bf16.msra.mxu0 0
        %1256 = vmatprep.subr.bf16.mxu0 0
        %1257 = vmatpush1.bf16.msra.mxu0 0
        %1258 = vmatprep.subr.bf16.mxu0 0
        %1259 = vmatpush1.bf16.msra.mxu0 0
        %1260 = vmatprep.subr.bf16.mxu0 0
        %1261 = vmatpush1.bf16.msra.mxu0 %v1241
        %1262 = vmatprep.subr.bf16.mxu0 0
        %1263 = vmatpush2.bf16.msra.mxu0 0
        %1264 = vmatprep.subr.bf16.mxu0 0
        %1265 = vmatpush2.bf16.msra.mxu0 0
        %1266 = vmatprep.subr.bf16.mxu0 0
        %1267 = vmatpush2.bf16.msra.mxu0 0
        %1268 = vmatprep.subr.bf16.mxu0 0
        %1269 = vmatpush2.bf16.msra.mxu0 0
        %1270 = vmatprep.subr.bf16.mxu0 0
        %1271 = vmatpush2.bf16.msra.mxu0 0
        %1272 = vmatprep.subr.bf16.mxu0 0
        %1273 = vmatpush2.bf16.msra.mxu0 0
        %1274 = vmatprep.subr.bf16.mxu0 0
        %1275 = vmatpush2.bf16.msra.mxu0 0
        %1276 = vmatprep.subr.bf16.mxu0 0
        %1277 = vmatpush2.bf16.msra.mxu0 0
        %1278 = vmatprep.mubr.bf16.mxu0 0
        %1279 = vmatmul.mubr.bf16.gmra.mxu0 %v1244
        %v1280 = vpop.f32.mrf.mxu0
        %v1281 = vadd.f32 %v1233, %v1280
        %v1282 = vpop.f32.mrf.mxu0
        %v1283 = vpop.f32.mrf.mxu0
        %v1284 = vpop.f32.mrf.mxu0
        %1285 = vdwg.mxu0
        %v1286 = vadd.f32 %v1225, %v1281
        %v1287 = vxor.u32 %v1286, 2147483648
        %v1288 = vmul.f32 %v1287, 1.442695
        %v1289 = vpow.pop %v1288
        %v1290 = vadd.f32 %v1289, 1.0
        %v1291 = vrcp.pop %v1290
        %v1292 = vmul.f32 1.0, %v1291
        %1294 = vrot.lane.b32.xlu0 %v1281, 96
        %v1295 = vpop.permute.xlu0 %1294
        %v1297 = vmul.f32 %v1292, %v1295
        %1299 = vrot.lane.b32.xlu0 %v1297, 32
        %v1300 = vpop.permute.xlu0 %1299
        %v1302 = vadd.f32 %v1225, %v1300
        %v1303 = vtanh.pop %v1302
        %v1304 = vsub.f32 1.0, %v1292
        %1306 = vrot.lane.b32.xlu0 %v1303, 112
        %v1307 = vpop.permute.xlu0 %1306
        %v1309 = vmul.f32 %v1304, %v1307
        %v1310 = vmul.f32 %v1292, %v1211
        %v1311 = vadd.f32 %v1309, %v1310
        %v1312 = vpack.c.bf16 %v1311, %v1311
        %v1314 = vunpack.c.l.b16 %v1312
        %v1315 = vpack.c.b16 %v1314, %v1314
        %1316 = vrot.lane.b32.xlu0 %v1315, 112
        %v1317 = vpop.permute.xlu0 %1316
        %s1319 = smul.addr %s1222, 4
        %s1320 = scalar_lea.vmem %s518, %s1319 [#allocation13]
        %1321 = vst.msk [vmem:[%s1320] sm:$0xf] %vm918, %v1317
        %s1322 = smul.u32 %s34, 4294967293
        %s1323 = sadd.s32 %s1322, 5
        %s1324 = smul.u32 %s1323, 8
        %s1325 = scalar_lea.vmem [#allocation2], %s1324
        %v1326 = vld [vmem:[%s1325] sm:$0xff]
        %v1327 = vld [vmem:[%s462] sm:$0xf]
        %v1328 = vld [vmem:[%s462 + $0x4] sm:$0xf]
        %v1329 = vld [vmem:[%s534] sm:$0x1]
        %v1331 = vlaneseq
        %v1332 = vshrl.u32 %v1331, 7
        %v1333 = vsub.s32 0, %v1332
        %v1334 = vrot.slane %v1329, %v1333
        %1336 = vrot.lane.b32.xlu0 %v1312, 112
        %v1337 = vpop.permute.xlu0 %1336
        %v1340 = vunpack.c.l.b16 %v1327
        %v1341 = vunpack.c.l.b16 %v1328
        %v1342 = vpack.c.b16 %v1341, %v1340
        %v1345 = vsel %vm835, %v1337, 0
        %1347 = vmatprep.subr.bf16.mxu0 0
        %1348 = vmatpush1.bf16.msra.mxu0 0
        %1349 = vmatprep.subr.bf16.mxu0 0
        %1350 = vmatpush1.bf16.msra.mxu0 0
        %1351 = vmatprep.subr.bf16.mxu0 0
        %1352 = vmatpush1.bf16.msra.mxu0 0
        %1353 = vmatprep.subr.bf16.mxu0 0
        %1354 = vmatpush1.bf16.msra.mxu0 0
        %1355 = vmatprep.subr.bf16.mxu0 0
        %1356 = vmatpush1.bf16.msra.mxu0 0
        %1357 = vmatprep.subr.bf16.mxu0 0
        %1358 = vmatpush1.bf16.msra.mxu0 0
        %1359 = vmatprep.subr.bf16.mxu0 0
        %1360 = vmatpush1.bf16.msra.mxu0 0
        %1361 = vmatprep.subr.bf16.mxu0 0
        %1362 = vmatpush1.bf16.msra.mxu0 %v1342
        %1363 = vmatprep.subr.bf16.mxu0 0
        %1364 = vmatpush2.bf16.msra.mxu0 0
        %1365 = vmatprep.subr.bf16.mxu0 0
        %1366 = vmatpush2.bf16.msra.mxu0 0
        %1367 = vmatprep.subr.bf16.mxu0 0
        %1368 = vmatpush2.bf16.msra.mxu0 0
        %1369 = vmatprep.subr.bf16.mxu0 0
        %1370 = vmatpush2.bf16.msra.mxu0 0
        %1371 = vmatprep.subr.bf16.mxu0 0
        %1372 = vmatpush2.bf16.msra.mxu0 0
        %1373 = vmatprep.subr.bf16.mxu0 0
        %1374 = vmatpush2.bf16.msra.mxu0 0
        %1375 = vmatprep.subr.bf16.mxu0 0
        %1376 = vmatpush2.bf16.msra.mxu0 0
        %1377 = vmatprep.subr.bf16.mxu0 0
        %1378 = vmatpush2.bf16.msra.mxu0 0
        %1379 = vmatprep.mubr.bf16.mxu0 0
        %1380 = vmatmul.mubr.bf16.gmra.mxu0 %v1345
        %v1381 = vpop.f32.mrf.mxu0
        %v1382 = vadd.f32 %v1334, %v1381
        %v1383 = vpop.f32.mrf.mxu0
        %v1384 = vpop.f32.mrf.mxu0
        %v1385 = vpop.f32.mrf.mxu0
        %1386 = vdwg.mxu0
        %v1387 = vadd.f32 %v1326, %v1382
        %v1388 = vxor.u32 %v1387, 2147483648
        %v1389 = vmul.f32 %v1388, 1.442695
        %v1390 = vpow.pop %v1389
        %v1391 = vadd.f32 %v1390, 1.0
        %v1392 = vrcp.pop %v1391
        %v1393 = vmul.f32 1.0, %v1392
        %1395 = vrot.lane.b32.xlu0 %v1382, 96
        %v1396 = vpop.permute.xlu0 %1395
        %v1398 = vmul.f32 %v1393, %v1396
        %1400 = vrot.lane.b32.xlu0 %v1398, 32
        %v1401 = vpop.permute.xlu0 %1400
        %v1403 = vadd.f32 %v1326, %v1401
        %v1404 = vtanh.pop %v1403
        %v1405 = vsub.f32 1.0, %v1393
        %1407 = vrot.lane.b32.xlu0 %v1404, 112
        %v1408 = vpop.permute.xlu0 %1407
        %v1410 = vmul.f32 %v1405, %v1408
        %v1411 = vmul.f32 %v1393, %v1311
        %v1412 = vadd.f32 %v1410, %v1411
        %v1413 = vpack.c.bf16 %v1412, %v1412
        %v1415 = vunpack.c.l.b16 %v1413
        %v1416 = vpack.c.b16 %v1415, %v1415
        %1417 = vrot.lane.b32.xlu0 %v1416, 112
        %v1418 = vpop.permute.xlu0 %1417
        %s1420 = smul.addr %s1323, 4
        %s1421 = scalar_lea.vmem %s518, %s1420 [#allocation13]
        %1422 = vst.msk [vmem:[%s1421] sm:$0xf] %vm918, %v1418
        %s1423 = smul.u32 %s34, 4294967291
        %s1424 = sadd.s32 %s1423, 6
        %s1425 = smul.u32 %s1424, 8
        %s1426 = scalar_lea.vmem [#allocation2], %s1425
        %v1427 = vld [vmem:[%s1426] sm:$0xff]
        %v1428 = vld [vmem:[%s462] sm:$0xf]
        %v1429 = vld [vmem:[%s462 + $0x4] sm:$0xf]
        %v1430 = vld [vmem:[%s534] sm:$0x1]
        %v1432 = vlaneseq
        %v1433 = vshrl.u32 %v1432, 7
        %v1434 = vsub.s32 0, %v1433
        %v1435 = vrot.slane %v1430, %v1434
        %1437 = vrot.lane.b32.xlu0 %v1413, 112
        %v1438 = vpop.permute.xlu0 %1437
        %v1441 = vunpack.c.l.b16 %v1428
        %v1442 = vunpack.c.l.b16 %v1429
        %v1443 = vpack.c.b16 %v1442, %v1441
        %v1446 = vsel %vm835, %v1438, 0
        %1448 = vmatprep.subr.bf16.mxu0 0
        %1449 = vmatpush1.bf16.msra.mxu0 0
        %1450 = vmatprep.subr.bf16.mxu0 0
        %1451 = vmatpush1.bf16.msra.mxu0 0
        %1452 = vmatprep.subr.bf16.mxu0 0
        %1453 = vmatpush1.bf16.msra.mxu0 0
        %1454 = vmatprep.subr.bf16.mxu0 0
        %1455 = vmatpush1.bf16.msra.mxu0 0
        %1456 = vmatprep.subr.bf16.mxu0 0
        %1457 = vmatpush1.bf16.msra.mxu0 0
        %1458 = vmatprep.subr.bf16.mxu0 0
        %1459 = vmatpush1.bf16.msra.mxu0 0
        %1460 = vmatprep.subr.bf16.mxu0 0
        %1461 = vmatpush1.bf16.msra.mxu0 0
        %1462 = vmatprep.subr.bf16.mxu0 0
        %1463 = vmatpush1.bf16.msra.mxu0 %v1443
        %1464 = vmatprep.subr.bf16.mxu0 0
        %1465 = vmatpush2.bf16.msra.mxu0 0
        %1466 = vmatprep.subr.bf16.mxu0 0
        %1467 = vmatpush2.bf16.msra.mxu0 0
        %1468 = vmatprep.subr.bf16.mxu0 0
        %1469 = vmatpush2.bf16.msra.mxu0 0
        %1470 = vmatprep.subr.bf16.mxu0 0
        %1471 = vmatpush2.bf16.msra.mxu0 0
        %1472 = vmatprep.subr.bf16.mxu0 0
        %1473 = vmatpush2.bf16.msra.mxu0 0
        %1474 = vmatprep.subr.bf16.mxu0 0
        %1475 = vmatpush2.bf16.msra.mxu0 0
        %1476 = vmatprep.subr.bf16.mxu0 0
        %1477 = vmatpush2.bf16.msra.mxu0 0
        %1478 = vmatprep.subr.bf16.mxu0 0
        %1479 = vmatpush2.bf16.msra.mxu0 0
        %1480 = vmatprep.mubr.bf16.mxu0 0
        %1481 = vmatmul.mubr.bf16.gmra.mxu0 %v1446
        %v1482 = vpop.f32.mrf.mxu0
        %v1483 = vadd.f32 %v1435, %v1482
        %v1484 = vpop.f32.mrf.mxu0
        %v1485 = vpop.f32.mrf.mxu0
        %v1486 = vpop.f32.mrf.mxu0
        %1487 = vdwg.mxu0
        %v1488 = vadd.f32 %v1427, %v1483
        %v1489 = vxor.u32 %v1488, 2147483648
        %v1490 = vmul.f32 %v1489, 1.442695
        %v1491 = vpow.pop %v1490
        %v1492 = vadd.f32 %v1491, 1.0
        %v1493 = vrcp.pop %v1492
        %v1494 = vmul.f32 1.0, %v1493
        %1496 = vrot.lane.b32.xlu0 %v1483, 96
        %v1497 = vpop.permute.xlu0 %1496
        %v1499 = vmul.f32 %v1494, %v1497
        %1501 = vrot.lane.b32.xlu0 %v1499, 32
        %v1502 = vpop.permute.xlu0 %1501
        %v1504 = vadd.f32 %v1427, %v1502
        %v1505 = vtanh.pop %v1504
        %v1506 = vsub.f32 1.0, %v1494
        %1508 = vrot.lane.b32.xlu0 %v1505, 112
        %v1509 = vpop.permute.xlu0 %1508
        %v1511 = vmul.f32 %v1506, %v1509
        %v1512 = vmul.f32 %v1494, %v1412
        %v1513 = vadd.f32 %v1511, %v1512
        %v1514 = vpack.c.bf16 %v1513, %v1513
        %v1516 = vunpack.c.l.b16 %v1514
        %v1517 = vpack.c.b16 %v1516, %v1516
        %1518 = vrot.lane.b32.xlu0 %v1517, 112
        %v1519 = vpop.permute.xlu0 %1518
        %s1521 = smul.addr %s1424, 4
        %s1522 = scalar_lea.vmem %s518, %s1521 [#allocation13]
        %1523 = vst.msk [vmem:[%s1522] sm:$0xf] %vm918, %v1519
        %s1524 = smul.u32 %s34, 4294967289
        %s1525 = sadd.s32 %s1524, 7
        %s1526 = smul.u32 %s1525, 8
        %s1527 = scalar_lea.vmem [#allocation2], %s1526
        %v1528 = vld [vmem:[%s1527] sm:$0xff]
        %v1529 = vld [vmem:[%s462] sm:$0xf]
        %v1530 = vld [vmem:[%s462 + $0x4] sm:$0xf]
        %v1531 = vld [vmem:[%s534] sm:$0x1]
        %v1533 = vlaneseq
        %v1534 = vshrl.u32 %v1533, 7
        %v1535 = vsub.s32 0, %v1534
        %v1536 = vrot.slane %v1531, %v1535
        %1538 = vrot.lane.b32.xlu0 %v1514, 112
        %v1539 = vpop.permute.xlu0 %1538
        %v1542 = vunpack.c.l.b16 %v1529
        %v1543 = vunpack.c.l.b16 %v1530
        %v1544 = vpack.c.b16 %v1543, %v1542
        %v1547 = vsel %vm835, %v1539, 0
        %1549 = vmatprep.subr.bf16.mxu0 0
        %1550 = vmatpush1.bf16.msra.mxu0 0
        %1551 = vmatprep.subr.bf16.mxu0 0
        %1552 = vmatpush1.bf16.msra.mxu0 0
        %1553 = vmatprep.subr.bf16.mxu0 0
        %1554 = vmatpush1.bf16.msra.mxu0 0
        %1555 = vmatprep.subr.bf16.mxu0 0
        %1556 = vmatpush1.bf16.msra.mxu0 0
        %1557 = vmatprep.subr.bf16.mxu0 0
        %1558 = vmatpush1.bf16.msra.mxu0 0
        %1559 = vmatprep.subr.bf16.mxu0 0
        %1560 = vmatpush1.bf16.msra.mxu0 0
        %1561 = vmatprep.subr.bf16.mxu0 0
        %1562 = vmatpush1.bf16.msra.mxu0 0
        %1563 = vmatprep.subr.bf16.mxu0 0
        %1564 = vmatpush1.bf16.msra.mxu0 %v1544
        %1565 = vmatprep.subr.bf16.mxu0 0
        %1566 = vmatpush2.bf16.msra.mxu0 0
        %1567 = vmatprep.subr.bf16.mxu0 0
        %1568 = vmatpush2.bf16.msra.mxu0 0
        %1569 = vmatprep.subr.bf16.mxu0 0
        %1570 = vmatpush2.bf16.msra.mxu0 0
        %1571 = vmatprep.subr.bf16.mxu0 0
        %1572 = vmatpush2.bf16.msra.mxu0 0
        %1573 = vmatprep.subr.bf16.mxu0 0
        %1574 = vmatpush2.bf16.msra.mxu0 0
        %1575 = vmatprep.subr.bf16.mxu0 0
        %1576 = vmatpush2.bf16.msra.mxu0 0
        %1577 = vmatprep.subr.bf16.mxu0 0
        %1578 = vmatpush2.bf16.msra.mxu0 0
        %1579 = vmatprep.subr.bf16.mxu0 0
        %1580 = vmatpush2.bf16.msra.mxu0 0
        %1581 = vmatprep.mubr.bf16.mxu0 0
        %1582 = vmatmul.mubr.bf16.gmra.mxu0 %v1547
        %v1583 = vpop.f32.mrf.mxu0
        %v1584 = vadd.f32 %v1536, %v1583
        %v1585 = vpop.f32.mrf.mxu0
        %v1586 = vpop.f32.mrf.mxu0
        %v1587 = vpop.f32.mrf.mxu0
        %1588 = vdwg.mxu0
        %v1589 = vadd.f32 %v1528, %v1584
        %v1590 = vxor.u32 %v1589, 2147483648
        %v1591 = vmul.f32 %v1590, 1.442695
        %v1592 = vpow.pop %v1591
        %v1593 = vadd.f32 %v1592, 1.0
        %v1594 = vrcp.pop %v1593
        %v1595 = vmul.f32 1.0, %v1594
        %1597 = vrot.lane.b32.xlu0 %v1584, 96
        %v1598 = vpop.permute.xlu0 %1597
        %v1600 = vmul.f32 %v1595, %v1598
        %1602 = vrot.lane.b32.xlu0 %v1600, 32
        %v1603 = vpop.permute.xlu0 %1602
        %v1605 = vadd.f32 %v1528, %v1603
        %v1606 = vtanh.pop %v1605
        %v1607 = vsub.f32 1.0, %v1595
        %1609 = vrot.lane.b32.xlu0 %v1606, 112
        %v1610 = vpop.permute.xlu0 %1609
        %v1612 = vmul.f32 %v1607, %v1610
        %v1613 = vmul.f32 %v1595, %v1513
        %v1614 = vadd.f32 %v1612, %v1613
        %v1615 = vpack.c.bf16 %v1614, %v1614
        %v1617 = vunpack.c.l.b16 %v1615
        %v1618 = vpack.c.b16 %v1617, %v1617
        %1619 = vrot.lane.b32.xlu0 %v1618, 112
        %v1620 = vpop.permute.xlu0 %1619
        %s1622 = smul.addr %s1525, 4
        %s1623 = scalar_lea.vmem %s518, %s1622 [#allocation13]
        %1624 = vst.msk [vmem:[%s1623] sm:$0xf] %vm918, %v1620
        %1626 = vrot.lane.b32.xlu0 %v1614, 112
        %v1627 = vpop.permute.xlu0 %1626
        %1629 = vst.msk [vmem:[#allocation3] sm:$0xff] %vm835, %v1627
        %s1630 = sand.u32 %s258, 1
        %s1631 = scalar_lea.sflag [#allocation6], %s1630
        %s1632 = sand.u32 %s258, 1
        %s1633 = smul.addr %s1632, 32
        %s1634 = scalar_lea.vmem [#allocation13], %s1633
        // Predicated region
        $region73: #{tpu_custom_call.1} parent=47 // pred_check
          %p1635 = pneg %p268
        $region74: #{tpu_custom_call.1} parent=47 // pred_check_branch
          %1637 = sbr.rel (%p1635) target = $region76
        $region75: #{tpu_custom_call.1} parent=47 // pred_region
          %s1638 = smul.u32 %s35, 2
          %s1639 = ssub.s32 0, %s1638
          %s1640 = smul.u32 %s34, %s1639
          %s1641 = sadd.s32 %s35, %s1640
          %s1642 = smul.u32 8, %s1641
          %s1644 = ssub.s32 512, 512
          %1645 = vsyncadd %s1631, %s1644
          %s1646 = smul.addr %s34, 8
          %s1647 = sadd.s32 %s1642, %s1646
          %s1648 = smul.addr %s1647, 64
          %s1649 = scalar_lea.hbm %s7, %s1648
          %s1650 = sshll.u32 %s1634, 4
          %s1651 = int_to_ptr.vmem [resolvable:$true] %s1650
          %1656 = dma.vmem_to_hbm [thread:$0]  %s1651, 512, %s1649, %s1631, 64, 64, 4
        $region76: #{tpu_custom_call.1} parent=47 // pred_fallthru
          _
      $region48: #{tpu_custom_call.1} parent=5 // pred_fallthru
        _
      %p1657 = scmp.le.s32.totalorder 2, %s25
      // Predicated region
      $region77: #{tpu_custom_call.1} parent=5 // pred_check
        %p1658 = pneg %p1657
      $region78: #{tpu_custom_call.1} parent=5 // pred_check_branch
        %1660 = sbr.rel (%p1658) target = $region80
      $region79: #{tpu_custom_call.1} parent=5 // pred_region
        %s1661 = ssub.s32 %s25, 2
        // Predicated region
        $region81: #{tpu_custom_call.1} parent=79 // pred_check
          %p1662 = pneg %p274
        $region82: #{tpu_custom_call.1} parent=79 // pred_check_branch
          %1664 = sbr.rel (%p1662) target = $region84
        $region83: #{tpu_custom_call.1} parent=79 // pred_region
          %s1665 = sand.u32 %s259, 1
          %s1666 = scalar_lea.sflag [#allocation6], %s1665
          %s1667 = sand.u32 %s259, 1
          %s1668 = smul.addr %s1667, 32
          %s1669 = scalar_lea.vmem [#allocation13], %s1668
          %1670 = dma.done %s1666, 512
        $region84: #{tpu_custom_call.1} parent=79 // pred_fallthru
          _
      $region80: #{tpu_custom_call.1} parent=5 // pred_fallthru
        _
    $region6: #{tpu_custom_call.1} parent=1 // loop_footer
      %s29 = sadd.s32 1, %s25
    $region7: #{tpu_custom_call.1} parent=1 // loop_footer_branch
      %24 = sbr.rel target = $region3
    $region8: #{tpu_custom_call.1} parent=1 // loop_exit
      _
    %1671 = vsyncpa [#allocation5], 1
    %s1672 = scalar_lea.sflag [#allocation5], 1
    %1673 = vsyncpa %s1672, 1
    %1674 = vsyncpa [#allocation8], 1
    %s1675 = scalar_lea.sflag [#allocation8], 1
    %1676 = vsyncpa %s1675, 1
    %1677 = vsyncpa [#allocation11], 1
    %s1678 = scalar_lea.sflag [#allocation11], 1
    %1679 = vsyncpa %s1678, 1
    %1680 = vsyncpa [#allocation6], 1
    %s1681 = scalar_lea.sflag [#allocation6], 1
    %1682 = vsyncpa %s1681, 1

</llo_original>
